<compile_context>
chip_gen: v7x
topology: tpu7x:2x2x1
jax: 0.10.0
libtpu: 0.0.40
codegen_flags: <defaults>
</compile_context>

<pallas_src>
import functools
import inspect

import jax
import jax.numpy as jnp
import numpy as np
from jax.experimental import pallas as pl
from jax.experimental.pallas import tpu as pltpu


# ---------------------------------------------------------------------------
# Kernels: one grid step = one (tm, H) token tile through the full layer chain.
# ---------------------------------------------------------------------------
def _pipe_hidden_kernel(x_ref, w_ref, b_ref, y_ref, hid_ref):
    """x_ref: (tm,H)  w_ref: (n_layers,H,H) (in,out)  b_ref: (n_layers,H)
    y_ref: (tm,H)  hid_ref: (L,tm,H) = inputs entering each middle block."""
    n_layers = w_ref.shape[0]

    h = x_ref[...].astype(jnp.float32)

    # pre
    h = jnp.dot(h, w_ref[0], preferred_element_type=jnp.float32) + b_ref[0][None, :]

    # middle blocks: record the input of each block, then apply it
    for l in range(1, n_layers - 1):
        hid_ref[l - 1] = h.astype(hid_ref.dtype)
        h = jnp.dot(h, w_ref[l], preferred_element_type=jnp.float32) + b_ref[l][None, :]

    # post
    h = (jnp.dot(h, w_ref[n_layers - 1], preferred_element_type=jnp.float32)
         + b_ref[n_layers - 1][None, :])

    y_ref[...] = h.astype(y_ref.dtype)


def _pipe_kernel(x_ref, w_ref, b_ref, y_ref):
    """Same as above without the hidden-state output."""
    n_layers = w_ref.shape[0]
    h = x_ref[...].astype(jnp.float32)
    for l in range(n_layers):
        h = jnp.dot(h, w_ref[l], preferred_element_type=jnp.float32) + b_ref[l][None, :]
    y_ref[...] = h.astype(y_ref.dtype)


# ---------------------------------------------------------------------------
# Tiling / VMEM helpers.
# ---------------------------------------------------------------------------
def _choose_tiling(M, H, L, itemsize):
    """Return (tm, M_pad): token-tile size (multiple of 8) and padded row count.

    * Guarantees >= 2 tiles whenever M allows it so the single "parallel" grid axis can
      be sharded across both TensorCores on v7x.
    * Caps tm from a VMEM activation budget (double-buffered in/out/hidden blocks)
      rather than a fixed small constant, so per-step overhead is amortized.
    * M is padded up to a multiple of tm; padded rows are dropped by the caller
      (rows are fully independent under this per-token pipeline, so no mask needed).
    """
    m8 = max(8, -(-M // 8) * 8)
    # Per-row VMEM: double-buffered input + output + hidden blocks, plus f32 working set.
    per_row = H * itemsize * (2 + 2 + 2 * max(L, 1)) + 2 * H * 4
    act_budget = 8 << 20
    tm_cap = max(8, min(512, (act_budget // per_row) // 8 * 8))

    if m8 <= 8:
        return 8, 8
    if m8 <= 2 * tm_cap:
        tm = -(-(m8 // 2) // 8) * 8          # exactly two tiles
    else:
        tm = tm_cap
    n_tiles = -(-m8 // tm)
    return tm, tm * n_tiles


def _vmem_limit_bytes(n_layers, L, H, tm, itemsize):
    """Explicit scoped-VMEM limit sized to the kernel's real footprint (+margin)."""
    weights = 2 * n_layers * H * (H + 1) * itemsize          # worst case: double-buffered
    acts = tm * H * itemsize * (2 + 2 + 2 * max(L, 1))       # in/out/hidden blocks
    work = 4 * tm * H * 4                                    # f32 working copies
    need = weights + acts + work
    return int(min(max(2 * need, 32 << 20), 96 << 20))


def _blockspec_supports_pipeline_mode():
    if not hasattr(pl, "Buffered"):
        return False
    try:
        return "pipeline_mode" in inspect.signature(pl.BlockSpec).parameters
    except (TypeError, ValueError):
        return True   # cannot introspect; attempt and rely on runtime fallback


def _const_spec(block_shape, index_map, single_buffer):
    """BlockSpec for a block whose index_map is constant across the grid.

    Single-buffering (pl.Buffered(1)) halves the resident weight/bias VMEM footprint:
    the block never changes so double-buffering buys nothing.
    """
    if single_buffer:
        return pl.BlockSpec(block_shape, index_map, pipeline_mode=pl.Buffered(1))
    return pl.BlockSpec(block_shape, index_map)


# ---------------------------------------------------------------------------
# Forward wrapper.
# ---------------------------------------------------------------------------
@functools.partial(jax.jit, static_argnames=("return_hidden_states", "single_buffer_consts"))
def _forward_impl(x, w_all, b_all, return_hidden_states, single_buffer_consts):
    B, S, H = x.shape
    n_layers = w_all.shape[0]            # pre + L middle blocks + post
    L = n_layers - 2
    M = B * S
    itemsize = jnp.dtype(x.dtype).itemsize

    tm, M_pad = _choose_tiling(M, H, L, itemsize)
    n_tiles = M_pad // tm

    x2d = x.reshape(M, H)
    if M_pad != M:
        # Rows are independent, so zero-padding the token axis and slicing the result
        # back is exact; keeps every tile (8,128)-aligned and >= 2 tiles for megacore.
        x2d = jnp.pad(x2d, ((0, M_pad - M), (0, 0)))

    in_specs = [
        pl.BlockSpec((tm, H), lambda i: (i, 0)),                               # token tile
        _const_spec((n_layers, H, H), lambda i: (0, 0, 0), single_buffer_consts),  # weights
        _const_spec((n_layers, H), lambda i: (0, 0), single_buffer_consts),        # biases
    ]
    compiler_params = pltpu.CompilerParams(
        dimension_semantics=("parallel",),          # token tiles are independent
        vmem_limit_bytes=_vmem_limit_bytes(n_layers, L, H, tm, itemsize),
    )

    if return_hidden_states:
        y2d, hid = pl.pallas_call(
            _pipe_hidden_kernel,
            out_shape=(
                jax.ShapeDtypeStruct((M_pad, H), x.dtype),       # final output
                jax.ShapeDtypeStruct((L, M_pad, H), x.dtype),    # middle-block inputs
            ),
            grid_spec=pltpu.PrefetchScalarGridSpec(
                num_scalar_prefetch=0,
                grid=(n_tiles,),
                in_specs=in_specs,
                out_specs=[
                    pl.BlockSpec((tm, H), lambda i: (i, 0)),
                    pl.BlockSpec((L, tm, H), lambda i: (0, i, 0)),
                ],
            ),
            compiler_params=compiler_params,
        )(x2d, w_all, b_all)
        y = y2d[:M].reshape(B, S, H)
        mid = hid[:, :M].reshape(L, B, S, H)
        return y, mid

    y2d = pl.pallas_call(
        _pipe_kernel,
        out_shape=jax.ShapeDtypeStruct((M_pad, H), x.dtype),
        grid_spec=pltpu.PrefetchScalarGridSpec(
            num_scalar_prefetch=0,
            grid=(n_tiles,),
            in_specs=in_specs,
            out_specs=pl.BlockSpec((tm, H), lambda i: (i, 0)),
        ),
        compiler_params=compiler_params,
    )(x2d, w_all, b_all)
    return y2d[:M].reshape(B, S, H)


_PIPELINE_MODE_OK = None


def model_pipe_forward(x, w_all, b_all, return_hidden_states=True):
    """x: (B, S, H); w_all: (L+2, H, H) stored (in, out); b_all: (L+2, H)."""
    global _PIPELINE_MODE_OK
    if _PIPELINE_MODE_OK is None:
        _PIPELINE_MODE_OK = _blockspec_supports_pipeline_mode()
    if _PIPELINE_MODE_OK:
        try:
            return _forward_impl(x, w_all, b_all, return_hidden_states, True)
        except Exception:
            # This jax build rejects single-buffered constant blocks on the top-level
            # pallas_call pipeline; fall back to default double-buffering (identical
            # results, ~2x weight VMEM).
            _PIPELINE_MODE_OK = False
    return _forward_impl(x, w_all, b_all, return_hidden_states, False)


# ---------------------------------------------------------------------------
# Pure-JAX reference of the same pipeline.
# ---------------------------------------------------------------------------
def _reference_forward(x, w_all, b_all):
    B, S, H = x.shape
    h = x.reshape(B * S, H).astype(jnp.float32)
    hiddens = []
    n = w_all.shape[0]
    for l in range(n):
        if 0 < l < n - 1:
            hiddens.append(h)
        h = h @ w_all[l].astype(jnp.float32) + b_all[l].astype(jnp.float32)
    y = h.reshape(B, S, H)
    mid = jnp.stack(hiddens).reshape(n - 2, B, S, H)
    return y, mid


if __name__ == "__main__":
    # Small shapes consistent with the module: batch=2, seq=8, hidden=128, 4 middle blocks.
    B, S, H = 2, 8, 128
    L = 4                      # number of middle (pipeline) blocks
    n_layers = L + 2           # pre + L + post

    key = jax.random.PRNGKey(0)
    kx, kw, kb = jax.random.split(key, 3)

    x = jax.random.normal(kx, (B, S, H), dtype=jnp.float32)

    # Deterministic parameter init (nn.Linear-like scale). Stored as (in, out):
    # equivalent to transposing PyTorch's (out, in) weight.
    w_all = jax.random.normal(kw, (n_layers, H, H), dtype=jnp.float32) * (1.0 / np.sqrt(H))
    b_all = jax.random.normal(kb, (n_layers, H), dtype=jnp.float32) * 0.01

    y, mid_hidden = model_pipe_forward(x, w_all, b_all, return_hidden_states=True)
    jax.block_until_ready((y, mid_hidden))

    y_ref, mid_ref = _reference_forward(x, w_all, b_all)
    np.testing.assert_allclose(np.asarray(y), np.asarray(y_ref), rtol=1e-5, atol=1e-5)
    np.testing.assert_allclose(np.asarray(mid_hidden), np.asarray(mid_ref), rtol=1e-5, atol=1e-5)

    # Also exercise the return_hidden_states=False path.
    y_only = model_pipe_forward(x, w_all, b_all, return_hidden_states=False)
    jax.block_until_ready(y_only)
    np.testing.assert_allclose(np.asarray(y_only), np.asarray(y_ref), rtol=1e-5, atol=1e-5)

    print("KERNEL_OK")
</pallas_src>

<mosaic_0001>
module attributes {stable_mosaic.version = 11 : i64} {
  func.func @_pipe_hidden_kernel(%arg0: i32, %arg1: memref<8x128xf32, #tpu.memory_space<vmem>>, %arg2: memref<6x128x128xf32, #tpu.memory_space<vmem>>, %arg3: memref<6x128xf32, #tpu.memory_space<vmem>>, %arg4: memref<8x128xf32, #tpu.memory_space<vmem>>, %arg5: memref<4x8x128xf32, #tpu.memory_space<vmem>>) attributes {dimension_semantics = [#tpu.dimension_semantics<parallel>], iteration_bounds = array<i64: 2>, scalar_prefetch = 0 : i64, scratch_operands = 0 : i64, tpu.core_type = #tpu.core_type<tc>, window_params = [{transform_indices = @transform_0, window_bounds = array<i64: 8, 128>}, {pipeline_mode = #tpu.pipeline_mode<synchronous>, transform_indices = @transform_1, window_bounds = array<i64: 6, 128, 128>}, {pipeline_mode = #tpu.pipeline_mode<synchronous>, transform_indices = @transform_2, window_bounds = array<i64: 6, 128>}, {transform_indices = @transform_3, window_bounds = array<i64: 8, 128>}, {transform_indices = @transform_4, window_bounds = array<i64: 4, 8, 128>}]} {
    %c0 = arith.constant 0 : index
    %c0_0 = arith.constant 0 : index
    %0 = vector.load %arg1[%c0, %c0_0] : memref<8x128xf32, #tpu.memory_space<vmem>>, vector<8x128xf32>
    %c0_1 = arith.constant 0 : index
    %c0_2 = arith.constant 0 : index
    %c0_3 = arith.constant 0 : index
    %1 = vector.load %arg2[%c0_1, %c0_2, %c0_3] : memref<6x128x128xf32, #tpu.memory_space<vmem>>, vector<1x128x128xf32>
    %2 = vector.shape_cast %1 : vector<1x128x128xf32> to vector<128x128xf32>
    %cst = arith.constant dense<0.000000e+00> : vector<8x128xf32>
    %3 = tpu.matmul %0, %2, %cst {dimension_numbers = #tpu.dot_dimension_numbers<[1], [0], [0], [1], [0, 0, 1, 1], [], []>} : vector<8x128xf32>, vector<128x128xf32>, vector<8x128xf32> -> vector<8x128xf32>
    %c0_4 = arith.constant 0 : index
    %c0_5 = arith.constant 0 : index
    %4 = vector.load %arg3[%c0_4, %c0_5] : memref<6x128xf32, #tpu.memory_space<vmem>>, vector<1x128xf32>
    %5 = vector.shape_cast %4 : vector<1x128xf32> to vector<128xf32>
    %6 = vector.shape_cast %5 : vector<128xf32> to vector<1x128xf32>
    %7 = vector.broadcast %6 : vector<1x128xf32> to vector<8x128xf32>
    %8 = arith.addf %3, %7 : vector<8x128xf32>
    %c0_6 = arith.constant 0 : index
    %c0_7 = arith.constant 0 : index
    %c0_8 = arith.constant 0 : index
    %9 = vector.load %arg5[%c0_6, %c0_7, %c0_8] : memref<4x8x128xf32, #tpu.memory_space<vmem>>, vector<1x8x128xf32>
    %10 = vector.shape_cast %9 : vector<1x8x128xf32> to vector<8x128xf32>
    %11 = vector.shape_cast %8 : vector<8x128xf32> to vector<1x8x128xf32>
    tpu.vector_store %arg5[%c0_6, %c0_7, %c0_8], %11 {strides = array<i32>} : memref<4x8x128xf32, #tpu.memory_space<vmem>>, vector<1x8x128xf32>,
    %c1 = arith.constant 1 : index
    %c0_9 = arith.constant 0 : index
    %c0_10 = arith.constant 0 : index
    %12 = vector.load %arg2[%c1, %c0_9, %c0_10] : memref<6x128x128xf32, #tpu.memory_space<vmem>>, vector<1x128x128xf32>
    %13 = vector.shape_cast %12 : vector<1x128x128xf32> to vector<128x128xf32>
    %cst_11 = arith.constant dense<0.000000e+00> : vector<8x128xf32>
    %14 = tpu.matmul %8, %13, %cst_11 {dimension_numbers = #tpu.dot_dimension_numbers<[1], [0], [0], [1], [0, 0, 1, 1], [], []>} : vector<8x128xf32>, vector<128x128xf32>, vector<8x128xf32> -> vector<8x128xf32>
    %c1_12 = arith.constant 1 : index
    %c0_13 = arith.constant 0 : index
    %15 = vector.load %arg3[%c1_12, %c0_13] : memref<6x128xf32, #tpu.memory_space<vmem>>, vector<1x128xf32>
    %16 = vector.shape_cast %15 : vector<1x128xf32> to vector<128xf32>
    %17 = vector.shape_cast %16 : vector<128xf32> to vector<1x128xf32>
    %18 = vector.broadcast %17 : vector<1x128xf32> to vector<8x128xf32>
    %19 = arith.addf %14, %18 : vector<8x128xf32>
    %c1_14 = arith.constant 1 : index
    %c0_15 = arith.constant 0 : index
    %c0_16 = arith.constant 0 : index
    %20 = vector.load %arg5[%c1_14, %c0_15, %c0_16] : memref<4x8x128xf32, #tpu.memory_space<vmem>>, vector<1x8x128xf32>
    %21 = vector.shape_cast %20 : vector<1x8x128xf32> to vector<8x128xf32>
    %22 = vector.shape_cast %19 : vector<8x128xf32> to vector<1x8x128xf32>
    tpu.vector_store %arg5[%c1_14, %c0_15, %c0_16], %22 {strides = array<i32>} : memref<4x8x128xf32, #tpu.memory_space<vmem>>, vector<1x8x128xf32>,
    %c2 = arith.constant 2 : index
    %c0_17 = arith.constant 0 : index
    %c0_18 = arith.constant 0 : index
    %23 = vector.load %arg2[%c2, %c0_17, %c0_18] : memref<6x128x128xf32, #tpu.memory_space<vmem>>, vector<1x128x128xf32>
    %24 = vector.shape_cast %23 : vector<1x128x128xf32> to vector<128x128xf32>
    %cst_19 = arith.constant dense<0.000000e+00> : vector<8x128xf32>
    %25 = tpu.matmul %19, %24, %cst_19 {dimension_numbers = #tpu.dot_dimension_numbers<[1], [0], [0], [1], [0, 0, 1, 1], [], []>} : vector<8x128xf32>, vector<128x128xf32>, vector<8x128xf32> -> vector<8x128xf32>
    %c2_20 = arith.constant 2 : index
    %c0_21 = arith.constant 0 : index
    %26 = vector.load %arg3[%c2_20, %c0_21] : memref<6x128xf32, #tpu.memory_space<vmem>>, vector<1x128xf32>
    %27 = vector.shape_cast %26 : vector<1x128xf32> to vector<128xf32>
    %28 = vector.shape_cast %27 : vector<128xf32> to vector<1x128xf32>
    %29 = vector.broadcast %28 : vector<1x128xf32> to vector<8x128xf32>
    %30 = arith.addf %25, %29 : vector<8x128xf32>
    %c2_22 = arith.constant 2 : index
    %c0_23 = arith.constant 0 : index
    %c0_24 = arith.constant 0 : index
    %31 = vector.load %arg5[%c2_22, %c0_23, %c0_24] : memref<4x8x128xf32, #tpu.memory_space<vmem>>, vector<1x8x128xf32>
    %32 = vector.shape_cast %31 : vector<1x8x128xf32> to vector<8x128xf32>
    %33 = vector.shape_cast %30 : vector<8x128xf32> to vector<1x8x128xf32>
    tpu.vector_store %arg5[%c2_22, %c0_23, %c0_24], %33 {strides = array<i32>} : memref<4x8x128xf32, #tpu.memory_space<vmem>>, vector<1x8x128xf32>,
    %c3 = arith.constant 3 : index
    %c0_25 = arith.constant 0 : index
    %c0_26 = arith.constant 0 : index
    %34 = vector.load %arg2[%c3, %c0_25, %c0_26] : memref<6x128x128xf32, #tpu.memory_space<vmem>>, vector<1x128x128xf32>
    %35 = vector.shape_cast %34 : vector<1x128x128xf32> to vector<128x128xf32>
    %cst_27 = arith.constant dense<0.000000e+00> : vector<8x128xf32>
    %36 = tpu.matmul %30, %35, %cst_27 {dimension_numbers = #tpu.dot_dimension_numbers<[1], [0], [0], [1], [0, 0, 1, 1], [], []>} : vector<8x128xf32>, vector<128x128xf32>, vector<8x128xf32> -> vector<8x128xf32>
    %c3_28 = arith.constant 3 : index
    %c0_29 = arith.constant 0 : index
    %37 = vector.load %arg3[%c3_28, %c0_29] : memref<6x128xf32, #tpu.memory_space<vmem>>, vector<1x128xf32>
    %38 = vector.shape_cast %37 : vector<1x128xf32> to vector<128xf32>
    %39 = vector.shape_cast %38 : vector<128xf32> to vector<1x128xf32>
    %40 = vector.broadcast %39 : vector<1x128xf32> to vector<8x128xf32>
    %41 = arith.addf %36, %40 : vector<8x128xf32>
    %c3_30 = arith.constant 3 : index
    %c0_31 = arith.constant 0 : index
    %c0_32 = arith.constant 0 : index
    %42 = vector.load %arg5[%c3_30, %c0_31, %c0_32] : memref<4x8x128xf32, #tpu.memory_space<vmem>>, vector<1x8x128xf32>
    %43 = vector.shape_cast %42 : vector<1x8x128xf32> to vector<8x128xf32>
    %44 = vector.shape_cast %41 : vector<8x128xf32> to vector<1x8x128xf32>
    tpu.vector_store %arg5[%c3_30, %c0_31, %c0_32], %44 {strides = array<i32>} : memref<4x8x128xf32, #tpu.memory_space<vmem>>, vector<1x8x128xf32>,
    %c4 = arith.constant 4 : index
    %c0_33 = arith.constant 0 : index
    %c0_34 = arith.constant 0 : index
    %45 = vector.load %arg2[%c4, %c0_33, %c0_34] : memref<6x128x128xf32, #tpu.memory_space<vmem>>, vector<1x128x128xf32>
    %46 = vector.shape_cast %45 : vector<1x128x128xf32> to vector<128x128xf32>
    %cst_35 = arith.constant dense<0.000000e+00> : vector<8x128xf32>
    %47 = tpu.matmul %41, %46, %cst_35 {dimension_numbers = #tpu.dot_dimension_numbers<[1], [0], [0], [1], [0, 0, 1, 1], [], []>} : vector<8x128xf32>, vector<128x128xf32>, vector<8x128xf32> -> vector<8x128xf32>
    %c4_36 = arith.constant 4 : index
    %c0_37 = arith.constant 0 : index
    %48 = vector.load %arg3[%c4_36, %c0_37] : memref<6x128xf32, #tpu.memory_space<vmem>>, vector<1x128xf32>
    %49 = vector.shape_cast %48 : vector<1x128xf32> to vector<128xf32>
    %50 = vector.shape_cast %49 : vector<128xf32> to vector<1x128xf32>
    %51 = vector.broadcast %50 : vector<1x128xf32> to vector<8x128xf32>
    %52 = arith.addf %47, %51 : vector<8x128xf32>
    %c5 = arith.constant 5 : index
    %c0_38 = arith.constant 0 : index
    %c0_39 = arith.constant 0 : index
    %53 = vector.load %arg2[%c5, %c0_38, %c0_39] : memref<6x128x128xf32, #tpu.memory_space<vmem>>, vector<1x128x128xf32>
    %54 = vector.shape_cast %53 : vector<1x128x128xf32> to vector<128x128xf32>
    %cst_40 = arith.constant dense<0.000000e+00> : vector<8x128xf32>
    %55 = tpu.matmul %52, %54, %cst_40 {dimension_numbers = #tpu.dot_dimension_numbers<[1], [0], [0], [1], [0, 0, 1, 1], [], []>} : vector<8x128xf32>, vector<128x128xf32>, vector<8x128xf32> -> vector<8x128xf32>
    %c5_41 = arith.constant 5 : index
    %c0_42 = arith.constant 0 : index
    %56 = vector.load %arg3[%c5_41, %c0_42] : memref<6x128xf32, #tpu.memory_space<vmem>>, vector<1x128xf32>
    %57 = vector.shape_cast %56 : vector<1x128xf32> to vector<128xf32>
    %58 = vector.shape_cast %57 : vector<128xf32> to vector<1x128xf32>
    %59 = vector.broadcast %58 : vector<1x128xf32> to vector<8x128xf32>
    %60 = arith.addf %55, %59 : vector<8x128xf32>
    %c0_43 = arith.constant 0 : index
    %c0_44 = arith.constant 0 : index
    %61 = vector.load %arg4[%c0_43, %c0_44] : memref<8x128xf32, #tpu.memory_space<vmem>>, vector<8x128xf32>
    tpu.vector_store %arg4[%c0_43, %c0_44], %60 {strides = array<i32>} : memref<8x128xf32, #tpu.memory_space<vmem>>, vector<8x128xf32>,
    return
  }
  func.func @transform_0(%arg0: i32) -> (i32, i32) {
    %c0_i32 = arith.constant 0 : i32
    %c0_i32_0 = arith.constant 0 : i32
    return %arg0, %c0_i32 : i32, i32
  }
  func.func @transform_1(%arg0: i32) -> (i32, i32, i32) {
    %c0_i32 = arith.constant 0 : i32
    %c0_i32_0 = arith.constant 0 : i32
    %c0_i32_1 = arith.constant 0 : i32
    %c0_i32_2 = arith.constant 0 : i32
    return %c0_i32, %c0_i32_0, %c0_i32_1 : i32, i32, i32
  }
  func.func @transform_2(%arg0: i32) -> (i32, i32) {
    %c0_i32 = arith.constant 0 : i32
    %c0_i32_0 = arith.constant 0 : i32
    %c0_i32_1 = arith.constant 0 : i32
    return %c0_i32, %c0_i32_0 : i32, i32
  }
  func.func @transform_3(%arg0: i32) -> (i32, i32) {
    %c0_i32 = arith.constant 0 : i32
    %c0_i32_0 = arith.constant 0 : i32
    return %arg0, %c0_i32 : i32, i32
  }
  func.func @transform_4(%arg0: i32) -> (i32, i32, i32) {
    %c0_i32 = arith.constant 0 : i32
    %c0_i32_0 = arith.constant 0 : i32
    %c0_i32_1 = arith.constant 0 : i32
    return %c0_i32, %arg0, %c0_i32_0 : i32, i32, i32
  }
}

module attributes {stable_mosaic.version = 11 : i64} {
  func.func @_pipe_hidden_kernel(%arg0: i32, %arg1: memref<8x128xf32, #tpu.memory_space<vmem>>, %arg2: memref<6x128x128xf32, #tpu.memory_space<vmem>>, %arg3: memref<6x128xf32, #tpu.memory_space<vmem>>, %arg4: memref<8x128xf32, #tpu.memory_space<vmem>>, %arg5: memref<4x8x128xf32, #tpu.memory_space<vmem>>) attributes {dimension_semantics = [#tpu.dimension_semantics<parallel>], iteration_bounds = array<i64: 2>, scalar_prefetch = 0 : i64, scratch_operands = 0 : i64, tpu.core_type = #tpu.core_type<tc>, window_params = [{transform_indices = @transform_0, window_bounds = array<i64: 8, 128>}, {pipeline_mode = #tpu.pipeline_mode<synchronous>, transform_indices = @transform_1, window_bounds = array<i64: 6, 128, 128>}, {pipeline_mode = #tpu.pipeline_mode<synchronous>, transform_indices = @transform_2, window_bounds = array<i64: 6, 128>}, {transform_indices = @transform_3, window_bounds = array<i64: 8, 128>}, {transform_indices = @transform_4, window_bounds = array<i64: 4, 8, 128>}]} {
    %c0 = arith.constant 0 : index
    %c0_0 = arith.constant 0 : index
    %0 = vector.load %arg1[%c0, %c0_0] : memref<8x128xf32, #tpu.memory_space<vmem>>, vector<8x128xf32>
    %c0_1 = arith.constant 0 : index
    %c0_2 = arith.constant 0 : index
    %c0_3 = arith.constant 0 : index
    %1 = vector.load %arg2[%c0_1, %c0_2, %c0_3] : memref<6x128x128xf32, #tpu.memory_space<vmem>>, vector<1x128x128xf32>
    %2 = vector.shape_cast %1 : vector<1x128x128xf32> to vector<128x128xf32>
    %cst = arith.constant dense<0.000000e+00> : vector<8x128xf32>
    %3 = tpu.matmul %0, %2, %cst {dimension_numbers = #tpu.dot_dimension_numbers<[1], [0], [0], [1], [0, 0, 1, 1], [], []>} : vector<8x128xf32>, vector<128x128xf32>, vector<8x128xf32> -> vector<8x128xf32>
    %c0_4 = arith.constant 0 : index
    %c0_5 = arith.constant 0 : index
    %4 = vector.load %arg3[%c0_4, %c0_5] : memref<6x128xf32, #tpu.memory_space<vmem>>, vector<1x128xf32>
    %5 = vector.shape_cast %4 : vector<1x128xf32> to vector<128xf32>
    %6 = vector.shape_cast %5 : vector<128xf32> to vector<1x128xf32>
    %7 = vector.broadcast %6 : vector<1x128xf32> to vector<8x128xf32>
    %8 = arith.addf %3, %7 : vector<8x128xf32>
    %c0_6 = arith.constant 0 : index
    %c0_7 = arith.constant 0 : index
    %c0_8 = arith.constant 0 : index
    %9 = vector.load %arg5[%c0_6, %c0_7, %c0_8] : memref<4x8x128xf32, #tpu.memory_space<vmem>>, vector<1x8x128xf32>
    %10 = vector.shape_cast %9 : vector<1x8x128xf32> to vector<8x128xf32>
    %11 = vector.shape_cast %8 : vector<8x128xf32> to vector<1x8x128xf32>
    tpu.vector_store %arg5[%c0_6, %c0_7, %c0_8], %11 {strides = array<i32>} : memref<4x8x128xf32, #tpu.memory_space<vmem>>, vector<1x8x128xf32>,
    %c1 = arith.constant 1 : index
    %c0_9 = arith.constant 0 : index
    %c0_10 = arith.constant 0 : index
    %12 = vector.load %arg2[%c1, %c0_9, %c0_10] : memref<6x128x128xf32, #tpu.memory_space<vmem>>, vector<1x128x128xf32>
    %13 = vector.shape_cast %12 : vector<1x128x128xf32> to vector<128x128xf32>
    %cst_11 = arith.constant dense<0.000000e+00> : vector<8x128xf32>
    %14 = tpu.matmul %8, %13, %cst_11 {dimension_numbers = #tpu.dot_dimension_numbers<[1], [0], [0], [1], [0, 0, 1, 1], [], []>} : vector<8x128xf32>, vector<128x128xf32>, vector<8x128xf32> -> vector<8x128xf32>
    %c1_12 = arith.constant 1 : index
    %c0_13 = arith.constant 0 : index
    %15 = vector.load %arg3[%c1_12, %c0_13] : memref<6x128xf32, #tpu.memory_space<vmem>>, vector<1x128xf32>
    %16 = vector.shape_cast %15 : vector<1x128xf32> to vector<128xf32>
    %17 = vector.shape_cast %16 : vector<128xf32> to vector<1x128xf32>
    %18 = vector.broadcast %17 : vector<1x128xf32> to vector<8x128xf32>
    %19 = arith.addf %14, %18 : vector<8x128xf32>
    %c1_14 = arith.constant 1 : index
    %c0_15 = arith.constant 0 : index
    %c0_16 = arith.constant 0 : index
    %20 = vector.load %arg5[%c1_14, %c0_15, %c0_16] : memref<4x8x128xf32, #tpu.memory_space<vmem>>, vector<1x8x128xf32>
    %21 = vector.shape_cast %20 : vector<1x8x128xf32> to vector<8x128xf32>
    %22 = vector.shape_cast %19 : vector<8x128xf32> to vector<1x8x128xf32>
    tpu.vector_store %arg5[%c1_14, %c0_15, %c0_16], %22 {strides = array<i32>} : memref<4x8x128xf32, #tpu.memory_space<vmem>>, vector<1x8x128xf32>,
    %c2 = arith.constant 2 : index
    %c0_17 = arith.constant 0 : index
    %c0_18 = arith.constant 0 : index
    %23 = vector.load %arg2[%c2, %c0_17, %c0_18] : memref<6x128x128xf32, #tpu.memory_space<vmem>>, vector<1x128x128xf32>
    %24 = vector.shape_cast %23 : vector<1x128x128xf32> to vector<128x128xf32>
    %cst_19 = arith.constant dense<0.000000e+00> : vector<8x128xf32>
    %25 = tpu.matmul %19, %24, %cst_19 {dimension_numbers = #tpu.dot_dimension_numbers<[1], [0], [0], [1], [0, 0, 1, 1], [], []>} : vector<8x128xf32>, vector<128x128xf32>, vector<8x128xf32> -> vector<8x128xf32>
    %c2_20 = arith.constant 2 : index
    %c0_21 = arith.constant 0 : index
    %26 = vector.load %arg3[%c2_20, %c0_21] : memref<6x128xf32, #tpu.memory_space<vmem>>, vector<1x128xf32>
    %27 = vector.shape_cast %26 : vector<1x128xf32> to vector<128xf32>
    %28 = vector.shape_cast %27 : vector<128xf32> to vector<1x128xf32>
    %29 = vector.broadcast %28 : vector<1x128xf32> to vector<8x128xf32>
    %30 = arith.addf %25, %29 : vector<8x128xf32>
    %c2_22 = arith.constant 2 : index
    %c0_23 = arith.constant 0 : index
    %c0_24 = arith.constant 0 : index
    %31 = vector.load %arg5[%c2_22, %c0_23, %c0_24] : memref<4x8x128xf32, #tpu.memory_space<vmem>>, vector<1x8x128xf32>
    %32 = vector.shape_cast %31 : vector<1x8x128xf32> to vector<8x128xf32>
    %33 = vector.shape_cast %30 : vector<8x128xf32> to vector<1x8x128xf32>
    tpu.vector_store %arg5[%c2_22, %c0_23, %c0_24], %33 {strides = array<i32>} : memref<4x8x128xf32, #tpu.memory_space<vmem>>, vector<1x8x128xf32>,
    %c3 = arith.constant 3 : index
    %c0_25 = arith.constant 0 : index
    %c0_26 = arith.constant 0 : index
    %34 = vector.load %arg2[%c3, %c0_25, %c0_26] : memref<6x128x128xf32, #tpu.memory_space<vmem>>, vector<1x128x128xf32>
    %35 = vector.shape_cast %34 : vector<1x128x128xf32> to vector<128x128xf32>
    %cst_27 = arith.constant dense<0.000000e+00> : vector<8x128xf32>
    %36 = tpu.matmul %30, %35, %cst_27 {dimension_numbers = #tpu.dot_dimension_numbers<[1], [0], [0], [1], [0, 0, 1, 1], [], []>} : vector<8x128xf32>, vector<128x128xf32>, vector<8x128xf32> -> vector<8x128xf32>
    %c3_28 = arith.constant 3 : index
    %c0_29 = arith.constant 0 : index
    %37 = vector.load %arg3[%c3_28, %c0_29] : memref<6x128xf32, #tpu.memory_space<vmem>>, vector<1x128xf32>
    %38 = vector.shape_cast %37 : vector<1x128xf32> to vector<128xf32>
    %39 = vector.shape_cast %38 : vector<128xf32> to vector<1x128xf32>
    %40 = vector.broadcast %39 : vector<1x128xf32> to vector<8x128xf32>
    %41 = arith.addf %36, %40 : vector<8x128xf32>
    %c3_30 = arith.constant 3 : index
    %c0_31 = arith.constant 0 : index
    %c0_32 = arith.constant 0 : index
    %42 = vector.load %arg5[%c3_30, %c0_31, %c0_32] : memref<4x8x128xf32, #tpu.memory_space<vmem>>, vector<1x8x128xf32>
    %43 = vector.shape_cast %42 : vector<1x8x128xf32> to vector<8x128xf32>
    %44 = vector.shape_cast %41 : vector<8x128xf32> to vector<1x8x128xf32>
    tpu.vector_store %arg5[%c3_30, %c0_31, %c0_32], %44 {strides = array<i32>} : memref<4x8x128xf32, #tpu.memory_space<vmem>>, vector<1x8x128xf32>,
    %c4 = arith.constant 4 : index
    %c0_33 = arith.constant 0 : index
    %c0_34 = arith.constant 0 : index
    %45 = vector.load %arg2[%c4, %c0_33, %c0_34] : memref<6x128x128xf32, #tpu.memory_space<vmem>>, vector<1x128x128xf32>
    %46 = vector.shape_cast %45 : vector<1x128x128xf32> to vector<128x128xf32>
    %cst_35 = arith.constant dense<0.000000e+00> : vector<8x128xf32>
    %47 = tpu.matmul %41, %46, %cst_35 {dimension_numbers = #tpu.dot_dimension_numbers<[1], [0], [0], [1], [0, 0, 1, 1], [], []>} : vector<8x128xf32>, vector<128x128xf32>, vector<8x128xf32> -> vector<8x128xf32>
    %c4_36 = arith.constant 4 : index
    %c0_37 = arith.constant 0 : index
    %48 = vector.load %arg3[%c4_36, %c0_37] : memref<6x128xf32, #tpu.memory_space<vmem>>, vector<1x128xf32>
    %49 = vector.shape_cast %48 : vector<1x128xf32> to vector<128xf32>
    %50 = vector.shape_cast %49 : vector<128xf32> to vector<1x128xf32>
    %51 = vector.broadcast %50 : vector<1x128xf32> to vector<8x128xf32>
    %52 = arith.addf %47, %51 : vector<8x128xf32>
    %c5 = arith.constant 5 : index
    %c0_38 = arith.constant 0 : index
    %c0_39 = arith.constant 0 : index
    %53 = vector.load %arg2[%c5, %c0_38, %c0_39] : memref<6x128x128xf32, #tpu.memory_space<vmem>>, vector<1x128x128xf32>
    %54 = vector.shape_cast %53 : vector<1x128x128xf32> to vector<128x128xf32>
    %cst_40 = arith.constant dense<0.000000e+00> : vector<8x128xf32>
    %55 = tpu.matmul %52, %54, %cst_40 {dimension_numbers = #tpu.dot_dimension_numbers<[1], [0], [0], [1], [0, 0, 1, 1], [], []>} : vector<8x128xf32>, vector<128x128xf32>, vector<8x128xf32> -> vector<8x128xf32>
    %c5_41 = arith.constant 5 : index
    %c0_42 = arith.constant 0 : index
    %56 = vector.load %arg3[%c5_41, %c0_42] : memref<6x128xf32, #tpu.memory_space<vmem>>, vector<1x128xf32>
    %57 = vector.shape_cast %56 : vector<1x128xf32> to vector<128xf32>
    %58 = vector.shape_cast %57 : vector<128xf32> to vector<1x128xf32>
    %59 = vector.broadcast %58 : vector<1x128xf32> to vector<8x128xf32>
    %60 = arith.addf %55, %59 : vector<8x128xf32>
    %c0_43 = arith.constant 0 : index
    %c0_44 = arith.constant 0 : index
    %61 = vector.load %arg4[%c0_43, %c0_44] : memref<8x128xf32, #tpu.memory_space<vmem>>, vector<8x128xf32>
    tpu.vector_store %arg4[%c0_43, %c0_44], %60 {strides = array<i32>} : memref<8x128xf32, #tpu.memory_space<vmem>>, vector<8x128xf32>,
    return
  }
  func.func @transform_0(%arg0: i32) -> (i32, i32) {
    %c0_i32 = arith.constant 0 : i32
    %c0_i32_0 = arith.constant 0 : i32
    return %arg0, %c0_i32 : i32, i32
  }
  func.func @transform_1(%arg0: i32) -> (i32, i32, i32) {
    %c0_i32 = arith.constant 0 : i32
    %c0_i32_0 = arith.constant 0 : i32
    %c0_i32_1 = arith.constant 0 : i32
    %c0_i32_2 = arith.constant 0 : i32
    return %c0_i32, %c0_i32_0, %c0_i32_1 : i32, i32, i32
  }
  func.func @transform_2(%arg0: i32) -> (i32, i32) {
    %c0_i32 = arith.constant 0 : i32
    %c0_i32_0 = arith.constant 0 : i32
    %c0_i32_1 = arith.constant 0 : i32
    return %c0_i32, %c0_i32_0 : i32, i32
  }
  func.func @transform_3(%arg0: i32) -> (i32, i32) {
    %c0_i32 = arith.constant 0 : i32
    %c0_i32_0 = arith.constant 0 : i32
    return %arg0, %c0_i32 : i32, i32
  }
  func.func @transform_4(%arg0: i32) -> (i32, i32, i32) {
    %c0_i32 = arith.constant 0 : i32
    %c0_i32_0 = arith.constant 0 : i32
    %c0_i32_1 = arith.constant 0 : i32
    return %c0_i32, %arg0, %c0_i32_0 : i32, i32, i32
  }
}

</mosaic_0001>

<llo_original>
// kernel: _forward_impl.1
$region0: #{_forward_impl.1}
  #allocation0 [shape = 'u32[]', space=smem, size = 0x4, offset = 0x4, fixed_abs, tag = 'smem constant byte address 0x4 - core index']
  #allocation1 [shape = 'u32[144,128]{1,0:T(1,128)}', space=vmem, size = 0x12000, scoped, tag = 'internal scratch']
  %s0 = inlined_call_operand.hbm [shape: f32[16,128], index: 0, kind: input, shape index: {}]
  %s1 = inlined_call_operand.hbm [shape: f32[6,128,128], index: 1, kind: input, shape index: {}]
  %s2 = inlined_call_operand.vmem [shape: f32[6,128], index: 2, kind: input, shape index: {}]
  %s3 = inlined_call_operand.hbm [shape: f32[16,128], index: 3, kind: output, shape index: {0}]
  %s4 = inlined_call_operand.hbm [shape: f32[4,16,128], index: 4, kind: output, shape index: {1}]
  %5 = xla_tuple %s3, %s4
  %s6 = sld [smem:[#allocation0]]
  $region61: #{_forward_impl.1} parent=0
    _
  %s8 = ssub.s32 1, %s6
  %s9 = scalar_select 0, %s8, %s6
  $region1: #{_forward_impl.1} parent=0
    #allocation2 [shape = 'u8[8192]{0}', space=vmem, size = 0x2000, scoped, tag = 'input window, operand 0']
    #allocation3 [shape = 's32[2]{0}', space=sflag, size = 0x8, scoped, tag = 'scoped memory for _forward_impl.1']
    #allocation4 [shape = 's32[2]{0}', space=sflag, size = 0x8, scoped, tag = 'scoped memory for _forward_impl.1']
    #allocation5 [shape = 'u8[393216]{0}', space=vmem, size = 0x60000, scoped, tag = 'input window, operand 1, single buffered']
    #allocation6 [shape = 's32[1]{0}', space=sflag, size = 0x4, scoped, tag = 'scoped memory for _forward_impl.1']
    #allocation7 [shape = 'u8[8192]{0}', space=vmem, size = 0x2000, scoped, tag = 'output window, operand 0']
    #allocation8 [shape = 'u8[32768]{0}', space=vmem, size = 0x8000, scoped, tag = 'output window, operand 1']
    #allocation9 [shape = 's32[2]{0}', space=sflag, size = 0x8, scoped, tag = 'scoped memory for _forward_impl.1']
    %10 = vsyncpa [#allocation3], 0
    %s11 = scalar_lea.sflag [#allocation3], 1
    %12 = vsyncpa %s11, 0
    %13 = vsyncpa [#allocation6], 0
    %14 = vsyncpa [#allocation4], 0
    %s15 = scalar_lea.sflag [#allocation4], 1
    %16 = vsyncpa %s15, 0
    %17 = vsyncpa [#allocation9], 0
    %s18 = scalar_lea.sflag [#allocation9], 1
    %19 = vsyncpa %s18, 0
    loop: start=0, step=1, limit=4
    $region2: #{_forward_impl.1} parent=1 // loop_pre_header
      _
    $region3: #{_forward_impl.1} parent=1 // loop_header
      %s21 = sphi 0, %s25
      %p22 = scmp.ge.s32.totalorder %s21, 4
      %s31 = sphi 0, %s33
      %s34 = sphi 0, %s31
      %s35 = sphi 0, %s34
      %s51 = sphi 0, %s35
      %s55 = sphi 0, %s55
      %s57 = sphi 0, %s55
      %s58 = sphi 0, %s57
      %s72 = sphi 0, %s58
      %s76 = sphi 0, %s76
      %s78 = sphi 0, %s76
      %s79 = sphi 0, %s78
      %s93 = sphi 0, %s79
      %s99 = sphi 0, %s101
      %s102 = sphi 0, %s99
      %s103 = sphi 0, %s102
      %s119 = sphi 0, %s103
      %s125 = sphi 0, %s127
      %s128 = sphi 0, %s125
      %s129 = sphi 0, %s128
      %s145 = sphi 0, %s129
    $region4: #{_forward_impl.1} parent=1 // loop_header_branch
      %24 = sbr.rel (%p22) target = $region8
    $region5: #{_forward_impl.1} parent=1 // loop_body
      %s26 = ssub.s32 %s21, 1
      %s27 = ssub.s32 %s21, 2
      %s28 = sadd.s32 %s21, 1
      %s29 = ssub.s32 %s21, %s28
      %p30 = scmp.eq.s32.totalorder %s29, 0
      %s32 = sadd.s32 %s31, 1
      %s33 = scalar_select %p30, %s31, %s32
      %p36 = pneg %p30
      %p37 = scmp.eq.s32.totalorder %s21, 1
      %p38 = por %p36, %p37
      %p39 = scmp.ne.s32.totalorder %s31, %s34
      %p40 = scmp.eq.s32.totalorder %s21, 0
      %p41 = por %p39, %p40
      %p42 = scmp.ne.s32.totalorder %s31, %s34
      %p43 = scmp.eq.s32.totalorder %s26, 1
      %p44 = por %p42, %p43
      %p45 = scmp.ne.s32.totalorder %s34, %s35
      %p46 = scmp.eq.s32.totalorder %s26, 0
      %p47 = por %p45, %p46
      %p48 = scmp.ne.s32.totalorder %s34, %s35
      %p49 = scmp.eq.s32.totalorder %s27, 1
      %p50 = por %p48, %p49
      %p52 = scmp.ne.s32.totalorder %s35, %s51
      %p53 = scmp.eq.s32.totalorder %s27, 0
      %p54 = por %p52, %p53
      %s56 = sadd.s32 %s55, 1
      %p59 = scmp.eq.s32.totalorder %s21, 1
      %p60 = scmp.ne.s32.totalorder %s55, %s57
      %p61 = scmp.eq.s32.totalorder %s21, 0
      %p62 = por %p60, %p61
      %p63 = scmp.ne.s32.totalorder %s55, %s57
      %p64 = scmp.eq.s32.totalorder %s26, 1
      %p65 = por %p63, %p64
      %p66 = scmp.ne.s32.totalorder %s57, %s58
      %p67 = scmp.eq.s32.totalorder %s26, 0
      %p68 = por %p66, %p67
      %p69 = scmp.ne.s32.totalorder %s57, %s58
      %p70 = scmp.eq.s32.totalorder %s27, 1
      %p71 = por %p69, %p70
      %p73 = scmp.ne.s32.totalorder %s58, %s72
      %p74 = scmp.eq.s32.totalorder %s27, 0
      %p75 = por %p73, %p74
      %s77 = sadd.s32 %s76, 1
      %p80 = scmp.eq.s32.totalorder %s21, 1
      %p81 = scmp.ne.s32.totalorder %s76, %s78
      %p82 = scmp.eq.s32.totalorder %s21, 0
      %p83 = por %p81, %p82
      %p84 = scmp.ne.s32.totalorder %s76, %s78
      %p85 = scmp.eq.s32.totalorder %s26, 1
      %p86 = por %p84, %p85
      %p87 = scmp.ne.s32.totalorder %s78, %s79
      %p88 = scmp.eq.s32.totalorder %s26, 0
      %p89 = por %p87, %p88
      %p90 = scmp.ne.s32.totalorder %s78, %s79
      %p91 = scmp.eq.s32.totalorder %s27, 1
      %p92 = por %p90, %p91
      %p94 = scmp.ne.s32.totalorder %s79, %s93
      %p95 = scmp.eq.s32.totalorder %s27, 0
      %p96 = por %p94, %p95
      %s97 = ssub.s32 %s21, %s28
      %p98 = scmp.eq.s32.totalorder %s97, 0
      %s100 = sadd.s32 %s99, 1
      %s101 = scalar_select %p98, %s99, %s100
      %p104 = pneg %p98
      %p105 = scmp.eq.s32.totalorder %s21, 1
      %p106 = por %p104, %p105
      %p107 = scmp.ne.s32.totalorder %s99, %s102
      %p108 = scmp.eq.s32.totalorder %s21, 0
      %p109 = por %p107, %p108
      %p110 = scmp.ne.s32.totalorder %s99, %s102
      %p111 = scmp.eq.s32.totalorder %s26, 1
      %p112 = por %p110, %p111
      %p113 = scmp.ne.s32.totalorder %s102, %s103
      %p114 = scmp.eq.s32.totalorder %s26, 0
      %p115 = por %p113, %p114
      %p116 = scmp.ne.s32.totalorder %s102, %s103
      %p117 = scmp.eq.s32.totalorder %s27, 1
      %p118 = por %p116, %p117
      %p120 = scmp.ne.s32.totalorder %s103, %s119
      %p121 = scmp.eq.s32.totalorder %s27, 0
      %p122 = por %p120, %p121
      %s123 = ssub.s32 %s21, %s28
      %p124 = scmp.eq.s32.totalorder %s123, 0
      %s126 = sadd.s32 %s125, 1
      %s127 = scalar_select %p124, %s125, %s126
      %p130 = pneg %p124
      %p131 = scmp.eq.s32.totalorder %s21, 1
      %p132 = por %p130, %p131
      %p133 = scmp.ne.s32.totalorder %s125, %s128
      %p134 = scmp.eq.s32.totalorder %s21, 0
      %p135 = por %p133, %p134
      %p136 = scmp.ne.s32.totalorder %s125, %s128
      %p137 = scmp.eq.s32.totalorder %s26, 1
      %p138 = por %p136, %p137
      %p139 = scmp.ne.s32.totalorder %s128, %s129
      %p140 = scmp.eq.s32.totalorder %s26, 0
      %p141 = por %p139, %p140
      %p142 = scmp.ne.s32.totalorder %s128, %s129
      %p143 = scmp.eq.s32.totalorder %s27, 1
      %p144 = por %p142, %p143
      %p146 = scmp.ne.s32.totalorder %s129, %s145
      %p147 = scmp.eq.s32.totalorder %s27, 0
      %p148 = por %p146, %p147
      %p149 = scmp.le.s32.totalorder 1, %s21
      %p150 = scmp.lt.s32.totalorder %s21, 3
      %p151 = pnand %p149, %p150
      %p152 = pneg %p151
      // Predicated region
      $region9: #{_forward_impl.1} parent=5 // pred_check
        _
      $region10: #{_forward_impl.1} parent=5 // pred_check_branch
        %154 = sbr.rel (%p151) target = $region12
      $region11: #{_forward_impl.1} parent=5 // pred_region
        %s155 = ssub.s32 %s21, 1
        // Predicated region
        $region13: #{_forward_impl.1} parent=11 // pred_check
          %p156 = pneg %p68
        $region14: #{_forward_impl.1} parent=11 // pred_check_branch
          %158 = sbr.rel (%p156) target = $region16
        $region15: #{_forward_impl.1} parent=11 // pred_region
          %s160 = ssub.s32 12288, 12288
          %161 = vsyncadd [#allocation6], %s160
          %s162 = sshll.u32 [#allocation5], 4
          %s163 = int_to_ptr.vmem [resolvable:$true] %s162
          %168 = dma.hbm_to_vmem [thread:$0]  %s1, 12288, %s163, [#allocation6], 128, 128, 8
        $region16: #{_forward_impl.1} parent=11 // pred_fallthru
          _
        // Predicated region
        $region17: #{_forward_impl.1} parent=11 // pred_check
          %p169 = pneg %p89
        $region18: #{_forward_impl.1} parent=11 // pred_check_branch
          %171 = sbr.rel (%p169) target = $region20
        $region19: #{_forward_impl.1} parent=11 // pred_region
          _
        $region20: #{_forward_impl.1} parent=11 // pred_fallthru
          _
      $region12: #{_forward_impl.1} parent=5 // pred_fallthru
        _
      %p172 = scmp.lt.s32.totalorder %s21, 2
      // Predicated region
      $region21: #{_forward_impl.1} parent=5 // pred_check
        %p173 = pneg %p172
      $region22: #{_forward_impl.1} parent=5 // pred_check_branch
        %175 = sbr.rel (%p173) target = $region24
      $region23: #{_forward_impl.1} parent=5 // pred_region
        // Predicated region
        $region25: #{_forward_impl.1} parent=23 // pred_check
          %p176 = pneg %p41
        $region26: #{_forward_impl.1} parent=23 // pred_check_branch
          %178 = sbr.rel (%p176) target = $region28
        $region27: #{_forward_impl.1} parent=23 // pred_region
          %s179 = sand.u32 %s31, 1
          %s180 = scalar_lea.sflag [#allocation3], %s179
          %s181 = sand.u32 %s31, 1
          %s182 = smul.addr %s181, 8
          %s183 = scalar_lea.vmem [#allocation2], %s182
          %s185 = ssub.s32 128, 128
          %186 = vsyncadd %s180, %s185
          %s187 = smul.addr %s21, 128
          %s188 = scalar_lea.hbm %s0, %s187
          %s190 = sshll.u32 %s183, 4
          %s191 = int_to_ptr.vmem [resolvable:$true] %s190
          %193 = dma.hbm_to_vmem [thread:$0]  %s188, 128, %s191, %s180
        $region28: #{_forward_impl.1} parent=23 // pred_fallthru
          _
      $region24: #{_forward_impl.1} parent=5 // pred_fallthru
        _
      %p194 = scmp.le.s32.totalorder 1, %s21
      %p195 = scmp.lt.s32.totalorder %s21, 3
      %p196 = pnand %p194, %p195
      %p197 = pneg %p196
      // Predicated region
      $region29: #{_forward_impl.1} parent=5 // pred_check
        _
      $region30: #{_forward_impl.1} parent=5 // pred_check_branch
        %199 = sbr.rel (%p196) target = $region32
      $region31: #{_forward_impl.1} parent=5 // pred_region
        %s200 = ssub.s32 %s21, 1
        %s201 = sand.u32 %s34, 1
        %s202 = scalar_lea.sflag [#allocation3], %s201
        %s203 = sand.u32 %s34, 1
        %s204 = smul.addr %s203, 8
        %s205 = scalar_lea.vmem [#allocation2], %s204
        // Predicated region
        $region33: #{_forward_impl.1} parent=31 // pred_check
          %p206 = pneg %p47
        $region34: #{_forward_impl.1} parent=31 // pred_check_branch
          %208 = sbr.rel (%p206) target = $region36
        $region35: #{_forward_impl.1} parent=31 // pred_region
          %209 = dma.done %s202, 128
        $region36: #{_forward_impl.1} parent=31 // pred_fallthru
          _
        // Predicated region
        $region37: #{_forward_impl.1} parent=31 // pred_check
          %p210 = pneg %p68
        $region38: #{_forward_impl.1} parent=31 // pred_check_branch
          %212 = sbr.rel (%p210) target = $region40
        $region39: #{_forward_impl.1} parent=31 // pred_region
          %213 = dma.done [#allocation6], 12288
        $region40: #{_forward_impl.1} parent=31 // pred_fallthru
          _
        %s214 = sand.u32 %s34, 1
        %s215 = scalar_lea.sflag [#allocation3], %s214
        %s216 = sand.u32 %s34, 1
        %s217 = smul.addr %s216, 8
        %s218 = scalar_lea.vmem [#allocation2], %s217
        %p219 = pneg %p47
        %p220 = pneg %p44
        %p221 = pneg %p68
        %p222 = pneg %p65
        %p223 = pneg %p89
        %p224 = pneg %p86
        %p225 = pneg %p115
        %p226 = pneg %p112
        %s227 = sand.u32 %s102, 1
        %s228 = scalar_lea.sflag [#allocation4], %s227
        %s229 = sand.u32 %s102, 1
        %s230 = smul.addr %s229, 8
        %s231 = scalar_lea.vmem [#allocation7], %s230
        %p232 = pneg %p141
        %p233 = pneg %p138
        %s234 = sand.u32 %s128, 1
        %s235 = scalar_lea.sflag [#allocation9], %s234
        %s236 = sand.u32 %s128, 1
        %s237 = smul.addr %s236, 32
        %s238 = scalar_lea.vmem [#allocation8], %s237
        %v239 = vld [vmem:[%s205] sm:$0xff]
        %v240 = vld [vmem:[#allocation5] sm:$0xff]
        %v241 = vld [vmem:[#allocation5 + $0x8] sm:$0xff]
        %v242 = vld [vmem:[#allocation5 + $0x10] sm:$0xff]
        %v243 = vld [vmem:[#allocation5 + $0x18] sm:$0xff]
        %v244 = vld [vmem:[#allocation5 + $0x20] sm:$0xff]
        %v245 = vld [vmem:[#allocation5 + $0x28] sm:$0xff]
        %v246 = vld [vmem:[#allocation5 + $0x30] sm:$0xff]
        %v247 = vld [vmem:[#allocation5 + $0x38] sm:$0xff]
        %v248 = vld [vmem:[#allocation5 + $0x40] sm:$0xff]
        %v249 = vld [vmem:[#allocation5 + $0x48] sm:$0xff]
        %v250 = vld [vmem:[#allocation5 + $0x50] sm:$0xff]
        %v251 = vld [vmem:[#allocation5 + $0x58] sm:$0xff]
        %v252 = vld [vmem:[#allocation5 + $0x60] sm:$0xff]
        %v253 = vld [vmem:[#allocation5 + $0x68] sm:$0xff]
        %v254 = vld [vmem:[#allocation5 + $0x70] sm:$0xff]
        %v255 = vld [vmem:[#allocation5 + $0x78] sm:$0xff]
        %v256 = vld [vmem:[%s2] sm:$0x1]
        %v257 = vlaneseq
        %v258 = vshrl.u32 %v257, 7
        %v259 = vsub.s32 0, %v258
        %v260 = vrot.slane %v256, %v259
        %261 = vmatprep.subr.mxu0 0.0
        %262 = vmatpush1.msra.mxu0 %v240
        %263 = vmatprep.subr.mxu0 0.0
        %264 = vmatpush1.msra.mxu0 %v241
        %265 = vmatprep.subr.mxu0 0.0
        %266 = vmatpush1.msra.mxu0 %v242
        %267 = vmatprep.subr.mxu0 0.0
        %268 = vmatpush1.msra.mxu0 %v243
        %269 = vmatprep.subr.mxu0 0.0
        %270 = vmatpush1.msra.mxu0 %v244
        %271 = vmatprep.subr.mxu0 0.0
        %272 = vmatpush1.msra.mxu0 %v245
        %273 = vmatprep.subr.mxu0 0.0
        %274 = vmatpush1.msra.mxu0 %v246
        %275 = vmatprep.subr.mxu0 0.0
        %276 = vmatpush1.msra.mxu0 %v247
        %277 = vmatprep.subr.mxu0 0.0
        %278 = vmatpush1.msra.mxu0 %v248
        %279 = vmatprep.subr.mxu0 0.0
        %280 = vmatpush1.msra.mxu0 %v249
        %281 = vmatprep.subr.mxu0 0.0
        %282 = vmatpush1.msra.mxu0 %v250
        %283 = vmatprep.subr.mxu0 0.0
        %284 = vmatpush1.msra.mxu0 %v251
        %285 = vmatprep.subr.mxu0 0.0
        %286 = vmatpush1.msra.mxu0 %v252
        %287 = vmatprep.subr.mxu0 0.0
        %288 = vmatpush1.msra.mxu0 %v253
        %289 = vmatprep.subr.mxu0 0.0
        %290 = vmatpush1.msra.mxu0 %v254
        %291 = vmatprep.subr.mxu0 0.0
        %292 = vmatpush1.msra.mxu0 %v255
        %293 = vmatprep.subr.mxu0 0.0
        %294 = vmatpush1.msra.mxu0 0.0
        %295 = vmatprep.subr.mxu0 0.0
        %296 = vmatpush1.msra.mxu0 0.0
        %297 = vmatprep.subr.mxu0 0.0
        %298 = vmatpush1.msra.mxu0 0.0
        %299 = vmatprep.subr.mxu0 0.0
        %300 = vmatpush1.msra.mxu0 0.0
        %301 = vmatprep.subr.mxu0 0.0
        %302 = vmatpush1.msra.mxu0 0.0
        %303 = vmatprep.subr.mxu0 0.0
        %304 = vmatpush1.msra.mxu0 0.0
        %305 = vmatprep.subr.mxu0 0.0
        %306 = vmatpush1.msra.mxu0 0.0
        %307 = vmatprep.subr.mxu0 0.0
        %308 = vmatpush1.msra.mxu0 0.0
        %309 = vmatprep.subr.mxu0 0.0
        %310 = vmatpush1.msra.mxu0 0.0
        %311 = vmatprep.subr.mxu0 0.0
        %312 = vmatpush1.msra.mxu0 0.0
        %313 = vmatprep.subr.mxu0 0.0
        %314 = vmatpush1.msra.mxu0 0.0
        %315 = vmatprep.subr.mxu0 0.0
        %316 = vmatpush1.msra.mxu0 0.0
        %317 = vmatprep.subr.mxu0 0.0
        %318 = vmatpush1.msra.mxu0 0.0
        %319 = vmatprep.subr.mxu0 0.0
        %320 = vmatpush1.msra.mxu0 0.0
        %321 = vmatprep.subr.mxu0 0.0
        %322 = vmatpush1.msra.mxu0 0.0
        %323 = vmatprep.subr.mxu0 0.0
        %324 = vmatpush1.msra.mxu0 0.0
        %325 = vmatprep.mubr.f32.mxu0 0.0
        %326 = vmatmul.mubr.f32.gmra.mrb[0].mxu0 %v239
        %v327 = vpop.f32.mrb[0].mxu0
        %v328 = vadd.f32 %v260, %v327
        %v329 = vpop.f32.mrb[0].mxu0
        %330 = vdwg.mxu0
        %331 = vst [vmem:[%s238] sm:$0xff] %v328
        %s332 = scalar_lea.vmem [#allocation5], 128
        %v333 = vld [vmem:[%s332] sm:$0xff]
        %v334 = vld [vmem:[%s332 + $0x8] sm:$0xff]
        %v335 = vld [vmem:[%s332 + $0x10] sm:$0xff]
        %v336 = vld [vmem:[%s332 + $0x18] sm:$0xff]
        %v337 = vld [vmem:[%s332 + $0x20] sm:$0xff]
        %v338 = vld [vmem:[%s332 + $0x28] sm:$0xff]
        %v339 = vld [vmem:[%s332 + $0x30] sm:$0xff]
        %v340 = vld [vmem:[%s332 + $0x38] sm:$0xff]
        %v341 = vld [vmem:[%s332 + $0x40] sm:$0xff]
        %v342 = vld [vmem:[%s332 + $0x48] sm:$0xff]
        %v343 = vld [vmem:[%s332 + $0x50] sm:$0xff]
        %v344 = vld [vmem:[%s332 + $0x58] sm:$0xff]
        %v345 = vld [vmem:[%s332 + $0x60] sm:$0xff]
        %v346 = vld [vmem:[%s332 + $0x68] sm:$0xff]
        %v347 = vld [vmem:[%s332 + $0x70] sm:$0xff]
        %v348 = vld [vmem:[%s332 + $0x78] sm:$0xff]
        %v349 = vld [vmem:[%s2 + $0x1] sm:$0x1]
        %v350 = vlaneseq
        %v351 = vshrl.u32 %v350, 7
        %v352 = vsub.s32 0, %v351
        %v353 = vrot.slane %v349, %v352
        %354 = vmatprep.subr.mxu0 0.0
        %355 = vmatpush1.msra.mxu0 %v333
        %356 = vmatprep.subr.mxu0 0.0
        %357 = vmatpush1.msra.mxu0 %v334
        %358 = vmatprep.subr.mxu0 0.0
        %359 = vmatpush1.msra.mxu0 %v335
        %360 = vmatprep.subr.mxu0 0.0
        %361 = vmatpush1.msra.mxu0 %v336
        %362 = vmatprep.subr.mxu0 0.0
        %363 = vmatpush1.msra.mxu0 %v337
        %364 = vmatprep.subr.mxu0 0.0
        %365 = vmatpush1.msra.mxu0 %v338
        %366 = vmatprep.subr.mxu0 0.0
        %367 = vmatpush1.msra.mxu0 %v339
        %368 = vmatprep.subr.mxu0 0.0
        %369 = vmatpush1.msra.mxu0 %v340
        %370 = vmatprep.subr.mxu0 0.0
        %371 = vmatpush1.msra.mxu0 %v341
        %372 = vmatprep.subr.mxu0 0.0
        %373 = vmatpush1.msra.mxu0 %v342
        %374 = vmatprep.subr.mxu0 0.0
        %375 = vmatpush1.msra.mxu0 %v343
        %376 = vmatprep.subr.mxu0 0.0
        %377 = vmatpush1.msra.mxu0 %v344
        %378 = vmatprep.subr.mxu0 0.0
        %379 = vmatpush1.msra.mxu0 %v345
        %380 = vmatprep.subr.mxu0 0.0
        %381 = vmatpush1.msra.mxu0 %v346
        %382 = vmatprep.subr.mxu0 0.0
        %383 = vmatpush1.msra.mxu0 %v347
        %384 = vmatprep.subr.mxu0 0.0
        %385 = vmatpush1.msra.mxu0 %v348
        %386 = vmatprep.subr.mxu0 0.0
        %387 = vmatpush1.msra.mxu0 0.0
        %388 = vmatprep.subr.mxu0 0.0
        %389 = vmatpush1.msra.mxu0 0.0
        %390 = vmatprep.subr.mxu0 0.0
        %391 = vmatpush1.msra.mxu0 0.0
        %392 = vmatprep.subr.mxu0 0.0
        %393 = vmatpush1.msra.mxu0 0.0
        %394 = vmatprep.subr.mxu0 0.0
        %395 = vmatpush1.msra.mxu0 0.0
        %396 = vmatprep.subr.mxu0 0.0
        %397 = vmatpush1.msra.mxu0 0.0
        %398 = vmatprep.subr.mxu0 0.0
        %399 = vmatpush1.msra.mxu0 0.0
        %400 = vmatprep.subr.mxu0 0.0
        %401 = vmatpush1.msra.mxu0 0.0
        %402 = vmatprep.subr.mxu0 0.0
        %403 = vmatpush1.msra.mxu0 0.0
        %404 = vmatprep.subr.mxu0 0.0
        %405 = vmatpush1.msra.mxu0 0.0
        %406 = vmatprep.subr.mxu0 0.0
        %407 = vmatpush1.msra.mxu0 0.0
        %408 = vmatprep.subr.mxu0 0.0
        %409 = vmatpush1.msra.mxu0 0.0
        %410 = vmatprep.subr.mxu0 0.0
        %411 = vmatpush1.msra.mxu0 0.0
        %412 = vmatprep.subr.mxu0 0.0
        %413 = vmatpush1.msra.mxu0 0.0
        %414 = vmatprep.subr.mxu0 0.0
        %415 = vmatpush1.msra.mxu0 0.0
        %416 = vmatprep.subr.mxu0 0.0
        %417 = vmatpush1.msra.mxu0 0.0
        %418 = vmatprep.mubr.f32.mxu0 0.0
        %419 = vmatmul.mubr.f32.gmra.mrb[0].mxu0 %v328
        %v420 = vpop.f32.mrb[0].mxu0
        %v421 = vadd.f32 %v353, %v420
        %v422 = vpop.f32.mrb[0].mxu0
        %423 = vdwg.mxu0
        %s424 = scalar_lea.vmem %s238, 8 [#allocation8]
        %425 = vst [vmem:[%s424] sm:$0xff] %v421
        %s426 = scalar_lea.vmem [#allocation5], 256
        %v427 = vld [vmem:[%s426] sm:$0xff]
        %v428 = vld [vmem:[%s426 + $0x8] sm:$0xff]
        %v429 = vld [vmem:[%s426 + $0x10] sm:$0xff]
        %v430 = vld [vmem:[%s426 + $0x18] sm:$0xff]
        %v431 = vld [vmem:[%s426 + $0x20] sm:$0xff]
        %v432 = vld [vmem:[%s426 + $0x28] sm:$0xff]
        %v433 = vld [vmem:[%s426 + $0x30] sm:$0xff]
        %v434 = vld [vmem:[%s426 + $0x38] sm:$0xff]
        %v435 = vld [vmem:[%s426 + $0x40] sm:$0xff]
        %v436 = vld [vmem:[%s426 + $0x48] sm:$0xff]
        %v437 = vld [vmem:[%s426 + $0x50] sm:$0xff]
        %v438 = vld [vmem:[%s426 + $0x58] sm:$0xff]
        %v439 = vld [vmem:[%s426 + $0x60] sm:$0xff]
        %v440 = vld [vmem:[%s426 + $0x68] sm:$0xff]
        %v441 = vld [vmem:[%s426 + $0x70] sm:$0xff]
        %v442 = vld [vmem:[%s426 + $0x78] sm:$0xff]
        %v443 = vld [vmem:[%s2 + $0x2] sm:$0x1]
        %v444 = vlaneseq
        %v445 = vshrl.u32 %v444, 7
        %v446 = vsub.s32 0, %v445
        %v447 = vrot.slane %v443, %v446
        %448 = vmatprep.subr.mxu0 0.0
        %449 = vmatpush1.msra.mxu0 %v427
        %450 = vmatprep.subr.mxu0 0.0
        %451 = vmatpush1.msra.mxu0 %v428
        %452 = vmatprep.subr.mxu0 0.0
        %453 = vmatpush1.msra.mxu0 %v429
        %454 = vmatprep.subr.mxu0 0.0
        %455 = vmatpush1.msra.mxu0 %v430
        %456 = vmatprep.subr.mxu0 0.0
        %457 = vmatpush1.msra.mxu0 %v431
        %458 = vmatprep.subr.mxu0 0.0
        %459 = vmatpush1.msra.mxu0 %v432
        %460 = vmatprep.subr.mxu0 0.0
        %461 = vmatpush1.msra.mxu0 %v433
        %462 = vmatprep.subr.mxu0 0.0
        %463 = vmatpush1.msra.mxu0 %v434
        %464 = vmatprep.subr.mxu0 0.0
        %465 = vmatpush1.msra.mxu0 %v435
        %466 = vmatprep.subr.mxu0 0.0
        %467 = vmatpush1.msra.mxu0 %v436
        %468 = vmatprep.subr.mxu0 0.0
        %469 = vmatpush1.msra.mxu0 %v437
        %470 = vmatprep.subr.mxu0 0.0
        %471 = vmatpush1.msra.mxu0 %v438
        %472 = vmatprep.subr.mxu0 0.0
        %473 = vmatpush1.msra.mxu0 %v439
        %474 = vmatprep.subr.mxu0 0.0
        %475 = vmatpush1.msra.mxu0 %v440
        %476 = vmatprep.subr.mxu0 0.0
        %477 = vmatpush1.msra.mxu0 %v441
        %478 = vmatprep.subr.mxu0 0.0
        %479 = vmatpush1.msra.mxu0 %v442
        %480 = vmatprep.subr.mxu0 0.0
        %481 = vmatpush1.msra.mxu0 0.0
        %482 = vmatprep.subr.mxu0 0.0
        %483 = vmatpush1.msra.mxu0 0.0
        %484 = vmatprep.subr.mxu0 0.0
        %485 = vmatpush1.msra.mxu0 0.0
        %486 = vmatprep.subr.mxu0 0.0
        %487 = vmatpush1.msra.mxu0 0.0
        %488 = vmatprep.subr.mxu0 0.0
        %489 = vmatpush1.msra.mxu0 0.0
        %490 = vmatprep.subr.mxu0 0.0
        %491 = vmatpush1.msra.mxu0 0.0
        %492 = vmatprep.subr.mxu0 0.0
        %493 = vmatpush1.msra.mxu0 0.0
        %494 = vmatprep.subr.mxu0 0.0
        %495 = vmatpush1.msra.mxu0 0.0
        %496 = vmatprep.subr.mxu0 0.0
        %497 = vmatpush1.msra.mxu0 0.0
        %498 = vmatprep.subr.mxu0 0.0
        %499 = vmatpush1.msra.mxu0 0.0
        %500 = vmatprep.subr.mxu0 0.0
        %501 = vmatpush1.msra.mxu0 0.0
        %502 = vmatprep.subr.mxu0 0.0
        %503 = vmatpush1.msra.mxu0 0.0
        %504 = vmatprep.subr.mxu0 0.0
        %505 = vmatpush1.msra.mxu0 0.0
        %506 = vmatprep.subr.mxu0 0.0
        %507 = vmatpush1.msra.mxu0 0.0
        %508 = vmatprep.subr.mxu0 0.0
        %509 = vmatpush1.msra.mxu0 0.0
        %510 = vmatprep.subr.mxu0 0.0
        %511 = vmatpush1.msra.mxu0 0.0
        %512 = vmatprep.mubr.f32.mxu0 0.0
        %513 = vmatmul.mubr.f32.gmra.mrb[0].mxu0 %v421
        %v514 = vpop.f32.mrb[0].mxu0
        %v515 = vadd.f32 %v447, %v514
        %v516 = vpop.f32.mrb[0].mxu0
        %517 = vdwg.mxu0
        %s518 = scalar_lea.vmem %s238, 16 [#allocation8]
        %519 = vst [vmem:[%s518] sm:$0xff] %v515
        %s520 = scalar_lea.vmem [#allocation5], 384
        %v521 = vld [vmem:[%s520] sm:$0xff]
        %v522 = vld [vmem:[%s520 + $0x8] sm:$0xff]
        %v523 = vld [vmem:[%s520 + $0x10] sm:$0xff]
        %v524 = vld [vmem:[%s520 + $0x18] sm:$0xff]
        %v525 = vld [vmem:[%s520 + $0x20] sm:$0xff]
        %v526 = vld [vmem:[%s520 + $0x28] sm:$0xff]
        %v527 = vld [vmem:[%s520 + $0x30] sm:$0xff]
        %v528 = vld [vmem:[%s520 + $0x38] sm:$0xff]
        %v529 = vld [vmem:[%s520 + $0x40] sm:$0xff]
        %v530 = vld [vmem:[%s520 + $0x48] sm:$0xff]
        %v531 = vld [vmem:[%s520 + $0x50] sm:$0xff]
        %v532 = vld [vmem:[%s520 + $0x58] sm:$0xff]
        %v533 = vld [vmem:[%s520 + $0x60] sm:$0xff]
        %v534 = vld [vmem:[%s520 + $0x68] sm:$0xff]
        %v535 = vld [vmem:[%s520 + $0x70] sm:$0xff]
        %v536 = vld [vmem:[%s520 + $0x78] sm:$0xff]
        %v537 = vld [vmem:[%s2 + $0x3] sm:$0x1]
        %v538 = vlaneseq
        %v539 = vshrl.u32 %v538, 7
        %v540 = vsub.s32 0, %v539
        %v541 = vrot.slane %v537, %v540
        %542 = vmatprep.subr.mxu0 0.0
        %543 = vmatpush1.msra.mxu0 %v521
        %544 = vmatprep.subr.mxu0 0.0
        %545 = vmatpush1.msra.mxu0 %v522
        %546 = vmatprep.subr.mxu0 0.0
        %547 = vmatpush1.msra.mxu0 %v523
        %548 = vmatprep.subr.mxu0 0.0
        %549 = vmatpush1.msra.mxu0 %v524
        %550 = vmatprep.subr.mxu0 0.0
        %551 = vmatpush1.msra.mxu0 %v525
        %552 = vmatprep.subr.mxu0 0.0
        %553 = vmatpush1.msra.mxu0 %v526
        %554 = vmatprep.subr.mxu0 0.0
        %555 = vmatpush1.msra.mxu0 %v527
        %556 = vmatprep.subr.mxu0 0.0
        %557 = vmatpush1.msra.mxu0 %v528
        %558 = vmatprep.subr.mxu0 0.0
        %559 = vmatpush1.msra.mxu0 %v529
        %560 = vmatprep.subr.mxu0 0.0
        %561 = vmatpush1.msra.mxu0 %v530
        %562 = vmatprep.subr.mxu0 0.0
        %563 = vmatpush1.msra.mxu0 %v531
        %564 = vmatprep.subr.mxu0 0.0
        %565 = vmatpush1.msra.mxu0 %v532
        %566 = vmatprep.subr.mxu0 0.0
        %567 = vmatpush1.msra.mxu0 %v533
        %568 = vmatprep.subr.mxu0 0.0
        %569 = vmatpush1.msra.mxu0 %v534
        %570 = vmatprep.subr.mxu0 0.0
        %571 = vmatpush1.msra.mxu0 %v535
        %572 = vmatprep.subr.mxu0 0.0
        %573 = vmatpush1.msra.mxu0 %v536
        %574 = vmatprep.subr.mxu0 0.0
        %575 = vmatpush1.msra.mxu0 0.0
        %576 = vmatprep.subr.mxu0 0.0
        %577 = vmatpush1.msra.mxu0 0.0
        %578 = vmatprep.subr.mxu0 0.0
        %579 = vmatpush1.msra.mxu0 0.0
        %580 = vmatprep.subr.mxu0 0.0
        %581 = vmatpush1.msra.mxu0 0.0
        %582 = vmatprep.subr.mxu0 0.0
        %583 = vmatpush1.msra.mxu0 0.0
        %584 = vmatprep.subr.mxu0 0.0
        %585 = vmatpush1.msra.mxu0 0.0
        %586 = vmatprep.subr.mxu0 0.0
        %587 = vmatpush1.msra.mxu0 0.0
        %588 = vmatprep.subr.mxu0 0.0
        %589 = vmatpush1.msra.mxu0 0.0
        %590 = vmatprep.subr.mxu0 0.0
        %591 = vmatpush1.msra.mxu0 0.0
        %592 = vmatprep.subr.mxu0 0.0
        %593 = vmatpush1.msra.mxu0 0.0
        %594 = vmatprep.subr.mxu0 0.0
        %595 = vmatpush1.msra.mxu0 0.0
        %596 = vmatprep.subr.mxu0 0.0
        %597 = vmatpush1.msra.mxu0 0.0
        %598 = vmatprep.subr.mxu0 0.0
        %599 = vmatpush1.msra.mxu0 0.0
        %600 = vmatprep.subr.mxu0 0.0
        %601 = vmatpush1.msra.mxu0 0.0
        %602 = vmatprep.subr.mxu0 0.0
        %603 = vmatpush1.msra.mxu0 0.0
        %604 = vmatprep.subr.mxu0 0.0
        %605 = vmatpush1.msra.mxu0 0.0
        %606 = vmatprep.mubr.f32.mxu0 0.0
        %607 = vmatmul.mubr.f32.gmra.mrb[0].mxu0 %v515
        %v608 = vpop.f32.mrb[0].mxu0
        %v609 = vadd.f32 %v541, %v608
        %v610 = vpop.f32.mrb[0].mxu0
        %611 = vdwg.mxu0
        %s612 = scalar_lea.vmem %s238, 24 [#allocation8]
        %613 = vst [vmem:[%s612] sm:$0xff] %v609
        %s614 = scalar_lea.vmem [#allocation5], 512
        %v615 = vld [vmem:[%s614] sm:$0xff]
        %v616 = vld [vmem:[%s614 + $0x8] sm:$0xff]
        %v617 = vld [vmem:[%s614 + $0x10] sm:$0xff]
        %v618 = vld [vmem:[%s614 + $0x18] sm:$0xff]
        %v619 = vld [vmem:[%s614 + $0x20] sm:$0xff]
        %v620 = vld [vmem:[%s614 + $0x28] sm:$0xff]
        %v621 = vld [vmem:[%s614 + $0x30] sm:$0xff]
        %v622 = vld [vmem:[%s614 + $0x38] sm:$0xff]
        %v623 = vld [vmem:[%s614 + $0x40] sm:$0xff]
        %v624 = vld [vmem:[%s614 + $0x48] sm:$0xff]
        %v625 = vld [vmem:[%s614 + $0x50] sm:$0xff]
        %v626 = vld [vmem:[%s614 + $0x58] sm:$0xff]
        %v627 = vld [vmem:[%s614 + $0x60] sm:$0xff]
        %v628 = vld [vmem:[%s614 + $0x68] sm:$0xff]
        %v629 = vld [vmem:[%s614 + $0x70] sm:$0xff]
        %v630 = vld [vmem:[%s614 + $0x78] sm:$0xff]
        %v631 = vld [vmem:[%s2 + $0x4] sm:$0x1]
        %v632 = vlaneseq
        %v633 = vshrl.u32 %v632, 7
        %v634 = vsub.s32 0, %v633
        %v635 = vrot.slane %v631, %v634
        %636 = vmatprep.subr.mxu0 0.0
        %637 = vmatpush1.msra.mxu0 %v615
        %638 = vmatprep.subr.mxu0 0.0
        %639 = vmatpush1.msra.mxu0 %v616
        %640 = vmatprep.subr.mxu0 0.0
        %641 = vmatpush1.msra.mxu0 %v617
        %642 = vmatprep.subr.mxu0 0.0
        %643 = vmatpush1.msra.mxu0 %v618
        %644 = vmatprep.subr.mxu0 0.0
        %645 = vmatpush1.msra.mxu0 %v619
        %646 = vmatprep.subr.mxu0 0.0
        %647 = vmatpush1.msra.mxu0 %v620
        %648 = vmatprep.subr.mxu0 0.0
        %649 = vmatpush1.msra.mxu0 %v621
        %650 = vmatprep.subr.mxu0 0.0
        %651 = vmatpush1.msra.mxu0 %v622
        %652 = vmatprep.subr.mxu0 0.0
        %653 = vmatpush1.msra.mxu0 %v623
        %654 = vmatprep.subr.mxu0 0.0
        %655 = vmatpush1.msra.mxu0 %v624
        %656 = vmatprep.subr.mxu0 0.0
        %657 = vmatpush1.msra.mxu0 %v625
        %658 = vmatprep.subr.mxu0 0.0
        %659 = vmatpush1.msra.mxu0 %v626
        %660 = vmatprep.subr.mxu0 0.0
        %661 = vmatpush1.msra.mxu0 %v627
        %662 = vmatprep.subr.mxu0 0.0
        %663 = vmatpush1.msra.mxu0 %v628
        %664 = vmatprep.subr.mxu0 0.0
        %665 = vmatpush1.msra.mxu0 %v629
        %666 = vmatprep.subr.mxu0 0.0
        %667 = vmatpush1.msra.mxu0 %v630
        %668 = vmatprep.subr.mxu0 0.0
        %669 = vmatpush1.msra.mxu0 0.0
        %670 = vmatprep.subr.mxu0 0.0
        %671 = vmatpush1.msra.mxu0 0.0
        %672 = vmatprep.subr.mxu0 0.0
        %673 = vmatpush1.msra.mxu0 0.0
        %674 = vmatprep.subr.mxu0 0.0
        %675 = vmatpush1.msra.mxu0 0.0
        %676 = vmatprep.subr.mxu0 0.0
        %677 = vmatpush1.msra.mxu0 0.0
        %678 = vmatprep.subr.mxu0 0.0
        %679 = vmatpush1.msra.mxu0 0.0
        %680 = vmatprep.subr.mxu0 0.0
        %681 = vmatpush1.msra.mxu0 0.0
        %682 = vmatprep.subr.mxu0 0.0
        %683 = vmatpush1.msra.mxu0 0.0
        %684 = vmatprep.subr.mxu0 0.0
        %685 = vmatpush1.msra.mxu0 0.0
        %686 = vmatprep.subr.mxu0 0.0
        %687 = vmatpush1.msra.mxu0 0.0
        %688 = vmatprep.subr.mxu0 0.0
        %689 = vmatpush1.msra.mxu0 0.0
        %690 = vmatprep.subr.mxu0 0.0
        %691 = vmatpush1.msra.mxu0 0.0
        %692 = vmatprep.subr.mxu0 0.0
        %693 = vmatpush1.msra.mxu0 0.0
        %694 = vmatprep.subr.mxu0 0.0
        %695 = vmatpush1.msra.mxu0 0.0
        %696 = vmatprep.subr.mxu0 0.0
        %697 = vmatpush1.msra.mxu0 0.0
        %698 = vmatprep.subr.mxu0 0.0
        %699 = vmatpush1.msra.mxu0 0.0
        %700 = vmatprep.mubr.f32.mxu0 0.0
        %701 = vmatmul.mubr.f32.gmra.mrb[0].mxu0 %v609
        %v702 = vpop.f32.mrb[0].mxu0
        %v703 = vadd.f32 %v635, %v702
        %v704 = vpop.f32.mrb[0].mxu0
        %705 = vdwg.mxu0
        %s706 = scalar_lea.vmem [#allocation5], 640
        %v707 = vld [vmem:[%s706] sm:$0xff]
        %v708 = vld [vmem:[%s706 + $0x8] sm:$0xff]
        %v709 = vld [vmem:[%s706 + $0x10] sm:$0xff]
        %v710 = vld [vmem:[%s706 + $0x18] sm:$0xff]
        %v711 = vld [vmem:[%s706 + $0x20] sm:$0xff]
        %v712 = vld [vmem:[%s706 + $0x28] sm:$0xff]
        %v713 = vld [vmem:[%s706 + $0x30] sm:$0xff]
        %v714 = vld [vmem:[%s706 + $0x38] sm:$0xff]
        %v715 = vld [vmem:[%s706 + $0x40] sm:$0xff]
        %v716 = vld [vmem:[%s706 + $0x48] sm:$0xff]
        %v717 = vld [vmem:[%s706 + $0x50] sm:$0xff]
        %v718 = vld [vmem:[%s706 + $0x58] sm:$0xff]
        %v719 = vld [vmem:[%s706 + $0x60] sm:$0xff]
        %v720 = vld [vmem:[%s706 + $0x68] sm:$0xff]
        %v721 = vld [vmem:[%s706 + $0x70] sm:$0xff]
        %v722 = vld [vmem:[%s706 + $0x78] sm:$0xff]
        %v723 = vld [vmem:[%s2 + $0x5] sm:$0x1]
        %v724 = vlaneseq
        %v725 = vshrl.u32 %v724, 7
        %v726 = vsub.s32 0, %v725
        %v727 = vrot.slane %v723, %v726
        %728 = vmatprep.subr.mxu0 0.0
        %729 = vmatpush1.msra.mxu0 %v707
        %730 = vmatprep.subr.mxu0 0.0
        %731 = vmatpush1.msra.mxu0 %v708
        %732 = vmatprep.subr.mxu0 0.0
        %733 = vmatpush1.msra.mxu0 %v709
        %734 = vmatprep.subr.mxu0 0.0
        %735 = vmatpush1.msra.mxu0 %v710
        %736 = vmatprep.subr.mxu0 0.0
        %737 = vmatpush1.msra.mxu0 %v711
        %738 = vmatprep.subr.mxu0 0.0
        %739 = vmatpush1.msra.mxu0 %v712
        %740 = vmatprep.subr.mxu0 0.0
        %741 = vmatpush1.msra.mxu0 %v713
        %742 = vmatprep.subr.mxu0 0.0
        %743 = vmatpush1.msra.mxu0 %v714
        %744 = vmatprep.subr.mxu0 0.0
        %745 = vmatpush1.msra.mxu0 %v715
        %746 = vmatprep.subr.mxu0 0.0
        %747 = vmatpush1.msra.mxu0 %v716
        %748 = vmatprep.subr.mxu0 0.0
        %749 = vmatpush1.msra.mxu0 %v717
        %750 = vmatprep.subr.mxu0 0.0
        %751 = vmatpush1.msra.mxu0 %v718
        %752 = vmatprep.subr.mxu0 0.0
        %753 = vmatpush1.msra.mxu0 %v719
        %754 = vmatprep.subr.mxu0 0.0
        %755 = vmatpush1.msra.mxu0 %v720
        %756 = vmatprep.subr.mxu0 0.0
        %757 = vmatpush1.msra.mxu0 %v721
        %758 = vmatprep.subr.mxu0 0.0
        %759 = vmatpush1.msra.mxu0 %v722
        %760 = vmatprep.subr.mxu0 0.0
        %761 = vmatpush1.msra.mxu0 0.0
        %762 = vmatprep.subr.mxu0 0.0
        %763 = vmatpush1.msra.mxu0 0.0
        %764 = vmatprep.subr.mxu0 0.0
        %765 = vmatpush1.msra.mxu0 0.0
        %766 = vmatprep.subr.mxu0 0.0
        %767 = vmatpush1.msra.mxu0 0.0
        %768 = vmatprep.subr.mxu0 0.0
        %769 = vmatpush1.msra.mxu0 0.0
        %770 = vmatprep.subr.mxu0 0.0
        %771 = vmatpush1.msra.mxu0 0.0
        %772 = vmatprep.subr.mxu0 0.0
        %773 = vmatpush1.msra.mxu0 0.0
        %774 = vmatprep.subr.mxu0 0.0
        %775 = vmatpush1.msra.mxu0 0.0
        %776 = vmatprep.subr.mxu0 0.0
        %777 = vmatpush1.msra.mxu0 0.0
        %778 = vmatprep.subr.mxu0 0.0
        %779 = vmatpush1.msra.mxu0 0.0
        %780 = vmatprep.subr.mxu0 0.0
        %781 = vmatpush1.msra.mxu0 0.0
        %782 = vmatprep.subr.mxu0 0.0
        %783 = vmatpush1.msra.mxu0 0.0
        %784 = vmatprep.subr.mxu0 0.0
        %785 = vmatpush1.msra.mxu0 0.0
        %786 = vmatprep.subr.mxu0 0.0
        %787 = vmatpush1.msra.mxu0 0.0
        %788 = vmatprep.subr.mxu0 0.0
        %789 = vmatpush1.msra.mxu0 0.0
        %790 = vmatprep.subr.mxu0 0.0
        %791 = vmatpush1.msra.mxu0 0.0
        %792 = vmatprep.mubr.f32.mxu0 0.0
        %793 = vmatmul.mubr.f32.gmra.mrb[0].mxu0 %v703
        %v794 = vpop.f32.mrb[0].mxu0
        %v795 = vadd.f32 %v727, %v794
        %v796 = vpop.f32.mrb[0].mxu0
        %797 = vdwg.mxu0
        %798 = vst [vmem:[%s231] sm:$0xff] %v795
        %s799 = sand.u32 %s102, 1
        %s800 = scalar_lea.sflag [#allocation4], %s799
        %s801 = sand.u32 %s102, 1
        %s802 = smul.addr %s801, 8
        %s803 = scalar_lea.vmem [#allocation7], %s802
        %s804 = sand.u32 %s128, 1
        %s805 = scalar_lea.sflag [#allocation9], %s804
        %s806 = sand.u32 %s128, 1
        %s807 = smul.addr %s806, 32
        %s808 = scalar_lea.vmem [#allocation8], %s807
        // Predicated region
        $region41: #{_forward_impl.1} parent=31 // pred_check
          %p809 = pneg %p112
        $region42: #{_forward_impl.1} parent=31 // pred_check_branch
          %811 = sbr.rel (%p809) target = $region44
        $region43: #{_forward_impl.1} parent=31 // pred_region
          %s813 = ssub.s32 128, 128
          %814 = vsyncadd %s800, %s813
          %s815 = smul.addr %s26, 128
          %s816 = scalar_lea.hbm %s3, %s815
          %s818 = sshll.u32 %s803, 4
          %s819 = int_to_ptr.vmem [resolvable:$true] %s818
          %821 = dma.vmem_to_hbm [thread:$0]  %s819, 128, %s816, %s800
        $region44: #{_forward_impl.1} parent=31 // pred_fallthru
          _
        // Predicated region
        $region45: #{_forward_impl.1} parent=31 // pred_check
          %p822 = pneg %p138
        $region46: #{_forward_impl.1} parent=31 // pred_check_branch
          %824 = sbr.rel (%p822) target = $region48
        $region47: #{_forward_impl.1} parent=31 // pred_region
          %s826 = ssub.s32 512, 512
          %827 = vsyncadd %s805, %s826
          %s828 = smul.addr %s26, 128
          %s829 = scalar_lea.hbm %s4, %s828
          %s830 = sshll.u32 %s808, 4
          %s831 = int_to_ptr.vmem [resolvable:$true] %s830
          %836 = dma.vmem_to_hbm [thread:$0]  %s831, 512, %s829, %s805, 128, 256, 8
        $region48: #{_forward_impl.1} parent=31 // pred_fallthru
          _
      $region32: #{_forward_impl.1} parent=5 // pred_fallthru
        _
      %p837 = scmp.le.s32.totalorder 2, %s21
      // Predicated region
      $region49: #{_forward_impl.1} parent=5 // pred_check
        %p838 = pneg %p837
      $region50: #{_forward_impl.1} parent=5 // pred_check_branch
        %840 = sbr.rel (%p838) target = $region52
      $region51: #{_forward_impl.1} parent=5 // pred_region
        %s841 = ssub.s32 %s21, 2
        // Predicated region
        $region53: #{_forward_impl.1} parent=51 // pred_check
          %p842 = pneg %p118
        $region54: #{_forward_impl.1} parent=51 // pred_check_branch
          %844 = sbr.rel (%p842) target = $region56
        $region55: #{_forward_impl.1} parent=51 // pred_region
          %s845 = sand.u32 %s103, 1
          %s846 = scalar_lea.sflag [#allocation4], %s845
          %s847 = sand.u32 %s103, 1
          %s848 = smul.addr %s847, 8
          %s849 = scalar_lea.vmem [#allocation7], %s848
          %850 = dma.done %s846, 128
        $region56: #{_forward_impl.1} parent=51 // pred_fallthru
          _
        // Predicated region
        $region57: #{_forward_impl.1} parent=51 // pred_check
          %p851 = pneg %p144
        $region58: #{_forward_impl.1} parent=51 // pred_check_branch
          %853 = sbr.rel (%p851) target = $region60
        $region59: #{_forward_impl.1} parent=51 // pred_region
          %s854 = sand.u32 %s129, 1
          %s855 = scalar_lea.sflag [#allocation9], %s854
          %s856 = sand.u32 %s129, 1
          %s857 = smul.addr %s856, 32
          %s858 = scalar_lea.vmem [#allocation8], %s857
          %859 = dma.done %s855, 512
        $region60: #{_forward_impl.1} parent=51 // pred_fallthru
          _
      $region52: #{_forward_impl.1} parent=5 // pred_fallthru
        _
    $region6: #{_forward_impl.1} parent=1 // loop_footer
      %s25 = sadd.s32 1, %s21
    $region7: #{_forward_impl.1} parent=1 // loop_footer_branch
      %20 = sbr.rel target = $region3
    $region8: #{_forward_impl.1} parent=1 // loop_exit
      _
    %860 = vsyncpa [#allocation3], 1
    %s861 = scalar_lea.sflag [#allocation3], 1
    %862 = vsyncpa %s861, 1
    %863 = vsyncpa [#allocation6], 1
    %864 = vsyncpa [#allocation4], 1
    %s865 = scalar_lea.sflag [#allocation4], 1
    %866 = vsyncpa %s865, 1
    %867 = vsyncpa [#allocation9], 1
    %s868 = scalar_lea.sflag [#allocation9], 1
    %869 = vsyncpa %s868, 1

// kernel: _forward_impl.1
$region0: #{_forward_impl.1}
  #allocation0 [shape = 'u32[]', space=smem, size = 0x4, offset = 0x4, fixed_abs, tag = 'smem constant byte address 0x4 - core index']
  #allocation1 [shape = 'u32[144,128]{1,0:T(1,128)}', space=vmem, size = 0x12000, scoped, tag = 'internal scratch']
  %s0 = inlined_call_operand.hbm [shape: f32[16,128], index: 0, kind: input, shape index: {}]
  %s1 = inlined_call_operand.hbm [shape: f32[6,128,128], index: 1, kind: input, shape index: {}]
  %s2 = inlined_call_operand.vmem [shape: f32[6,128], index: 2, kind: input, shape index: {}]
  %s3 = inlined_call_operand.hbm [shape: f32[16,128], index: 3, kind: output, shape index: {0}]
  %s4 = inlined_call_operand.hbm [shape: f32[4,16,128], index: 4, kind: output, shape index: {1}]
  %5 = xla_tuple %s3, %s4
  %s6 = sld [smem:[#allocation0]]
  $region61: #{_forward_impl.1} parent=0
    _
  %s8 = ssub.s32 1, %s6
  %s9 = scalar_select 0, %s8, %s6
  $region1: #{_forward_impl.1} parent=0
    #allocation2 [shape = 'u8[8192]{0}', space=vmem, size = 0x2000, scoped, tag = 'input window, operand 0']
    #allocation3 [shape = 's32[2]{0}', space=sflag, size = 0x8, scoped, tag = 'scoped memory for _forward_impl.1']
    #allocation4 [shape = 's32[2]{0}', space=sflag, size = 0x8, scoped, tag = 'scoped memory for _forward_impl.1']
    #allocation5 [shape = 'u8[393216]{0}', space=vmem, size = 0x60000, scoped, tag = 'input window, operand 1, single buffered']
    #allocation6 [shape = 's32[1]{0}', space=sflag, size = 0x4, scoped, tag = 'scoped memory for _forward_impl.1']
    #allocation7 [shape = 'u8[8192]{0}', space=vmem, size = 0x2000, scoped, tag = 'output window, operand 0']
    #allocation8 [shape = 'u8[32768]{0}', space=vmem, size = 0x8000, scoped, tag = 'output window, operand 1']
    #allocation9 [shape = 's32[2]{0}', space=sflag, size = 0x8, scoped, tag = 'scoped memory for _forward_impl.1']
    %10 = vsyncpa [#allocation3], 0
    %s11 = scalar_lea.sflag [#allocation3], 1
    %12 = vsyncpa %s11, 0
    %13 = vsyncpa [#allocation6], 0
    %14 = vsyncpa [#allocation4], 0
    %s15 = scalar_lea.sflag [#allocation4], 1
    %16 = vsyncpa %s15, 0
    %17 = vsyncpa [#allocation9], 0
    %s18 = scalar_lea.sflag [#allocation9], 1
    %19 = vsyncpa %s18, 0
    loop: start=0, step=1, limit=4
    $region2: #{_forward_impl.1} parent=1 // loop_pre_header
      _
    $region3: #{_forward_impl.1} parent=1 // loop_header
      %s21 = sphi 0, %s25
      %p22 = scmp.ge.s32.totalorder %s21, 4
      %s31 = sphi 0, %s33
      %s34 = sphi 0, %s31
      %s35 = sphi 0, %s34
      %s51 = sphi 0, %s35
      %s55 = sphi 0, %s55
      %s57 = sphi 0, %s55
      %s58 = sphi 0, %s57
      %s72 = sphi 0, %s58
      %s76 = sphi 0, %s76
      %s78 = sphi 0, %s76
      %s79 = sphi 0, %s78
      %s93 = sphi 0, %s79
      %s99 = sphi 0, %s101
      %s102 = sphi 0, %s99
      %s103 = sphi 0, %s102
      %s119 = sphi 0, %s103
      %s125 = sphi 0, %s127
      %s128 = sphi 0, %s125
      %s129 = sphi 0, %s128
      %s145 = sphi 0, %s129
    $region4: #{_forward_impl.1} parent=1 // loop_header_branch
      %24 = sbr.rel (%p22) target = $region8
    $region5: #{_forward_impl.1} parent=1 // loop_body
      %s26 = ssub.s32 %s21, 1
      %s27 = ssub.s32 %s21, 2
      %s28 = sadd.s32 %s21, 1
      %s29 = ssub.s32 %s21, %s28
      %p30 = scmp.eq.s32.totalorder %s29, 0
      %s32 = sadd.s32 %s31, 1
      %s33 = scalar_select %p30, %s31, %s32
      %p36 = pneg %p30
      %p37 = scmp.eq.s32.totalorder %s21, 1
      %p38 = por %p36, %p37
      %p39 = scmp.ne.s32.totalorder %s31, %s34
      %p40 = scmp.eq.s32.totalorder %s21, 0
      %p41 = por %p39, %p40
      %p42 = scmp.ne.s32.totalorder %s31, %s34
      %p43 = scmp.eq.s32.totalorder %s26, 1
      %p44 = por %p42, %p43
      %p45 = scmp.ne.s32.totalorder %s34, %s35
      %p46 = scmp.eq.s32.totalorder %s26, 0
      %p47 = por %p45, %p46
      %p48 = scmp.ne.s32.totalorder %s34, %s35
      %p49 = scmp.eq.s32.totalorder %s27, 1
      %p50 = por %p48, %p49
      %p52 = scmp.ne.s32.totalorder %s35, %s51
      %p53 = scmp.eq.s32.totalorder %s27, 0
      %p54 = por %p52, %p53
      %s56 = sadd.s32 %s55, 1
      %p59 = scmp.eq.s32.totalorder %s21, 1
      %p60 = scmp.ne.s32.totalorder %s55, %s57
      %p61 = scmp.eq.s32.totalorder %s21, 0
      %p62 = por %p60, %p61
      %p63 = scmp.ne.s32.totalorder %s55, %s57
      %p64 = scmp.eq.s32.totalorder %s26, 1
      %p65 = por %p63, %p64
      %p66 = scmp.ne.s32.totalorder %s57, %s58
      %p67 = scmp.eq.s32.totalorder %s26, 0
      %p68 = por %p66, %p67
      %p69 = scmp.ne.s32.totalorder %s57, %s58
      %p70 = scmp.eq.s32.totalorder %s27, 1
      %p71 = por %p69, %p70
      %p73 = scmp.ne.s32.totalorder %s58, %s72
      %p74 = scmp.eq.s32.totalorder %s27, 0
      %p75 = por %p73, %p74
      %s77 = sadd.s32 %s76, 1
      %p80 = scmp.eq.s32.totalorder %s21, 1
      %p81 = scmp.ne.s32.totalorder %s76, %s78
      %p82 = scmp.eq.s32.totalorder %s21, 0
      %p83 = por %p81, %p82
      %p84 = scmp.ne.s32.totalorder %s76, %s78
      %p85 = scmp.eq.s32.totalorder %s26, 1
      %p86 = por %p84, %p85
      %p87 = scmp.ne.s32.totalorder %s78, %s79
      %p88 = scmp.eq.s32.totalorder %s26, 0
      %p89 = por %p87, %p88
      %p90 = scmp.ne.s32.totalorder %s78, %s79
      %p91 = scmp.eq.s32.totalorder %s27, 1
      %p92 = por %p90, %p91
      %p94 = scmp.ne.s32.totalorder %s79, %s93
      %p95 = scmp.eq.s32.totalorder %s27, 0
      %p96 = por %p94, %p95
      %s97 = ssub.s32 %s21, %s28
      %p98 = scmp.eq.s32.totalorder %s97, 0
      %s100 = sadd.s32 %s99, 1
      %s101 = scalar_select %p98, %s99, %s100
      %p104 = pneg %p98
      %p105 = scmp.eq.s32.totalorder %s21, 1
      %p106 = por %p104, %p105
      %p107 = scmp.ne.s32.totalorder %s99, %s102
      %p108 = scmp.eq.s32.totalorder %s21, 0
      %p109 = por %p107, %p108
      %p110 = scmp.ne.s32.totalorder %s99, %s102
      %p111 = scmp.eq.s32.totalorder %s26, 1
      %p112 = por %p110, %p111
      %p113 = scmp.ne.s32.totalorder %s102, %s103
      %p114 = scmp.eq.s32.totalorder %s26, 0
      %p115 = por %p113, %p114
      %p116 = scmp.ne.s32.totalorder %s102, %s103
      %p117 = scmp.eq.s32.totalorder %s27, 1
      %p118 = por %p116, %p117
      %p120 = scmp.ne.s32.totalorder %s103, %s119
      %p121 = scmp.eq.s32.totalorder %s27, 0
      %p122 = por %p120, %p121
      %s123 = ssub.s32 %s21, %s28
      %p124 = scmp.eq.s32.totalorder %s123, 0
      %s126 = sadd.s32 %s125, 1
      %s127 = scalar_select %p124, %s125, %s126
      %p130 = pneg %p124
      %p131 = scmp.eq.s32.totalorder %s21, 1
      %p132 = por %p130, %p131
      %p133 = scmp.ne.s32.totalorder %s125, %s128
      %p134 = scmp.eq.s32.totalorder %s21, 0
      %p135 = por %p133, %p134
      %p136 = scmp.ne.s32.totalorder %s125, %s128
      %p137 = scmp.eq.s32.totalorder %s26, 1
      %p138 = por %p136, %p137
      %p139 = scmp.ne.s32.totalorder %s128, %s129
      %p140 = scmp.eq.s32.totalorder %s26, 0
      %p141 = por %p139, %p140
      %p142 = scmp.ne.s32.totalorder %s128, %s129
      %p143 = scmp.eq.s32.totalorder %s27, 1
      %p144 = por %p142, %p143
      %p146 = scmp.ne.s32.totalorder %s129, %s145
      %p147 = scmp.eq.s32.totalorder %s27, 0
      %p148 = por %p146, %p147
      %p149 = scmp.le.s32.totalorder 1, %s21
      %p150 = scmp.lt.s32.totalorder %s21, 3
      %p151 = pnand %p149, %p150
      %p152 = pneg %p151
      // Predicated region
      $region9: #{_forward_impl.1} parent=5 // pred_check
        _
      $region10: #{_forward_impl.1} parent=5 // pred_check_branch
        %154 = sbr.rel (%p151) target = $region12
      $region11: #{_forward_impl.1} parent=5 // pred_region
        %s155 = ssub.s32 %s21, 1
        // Predicated region
        $region13: #{_forward_impl.1} parent=11 // pred_check
          %p156 = pneg %p68
        $region14: #{_forward_impl.1} parent=11 // pred_check_branch
          %158 = sbr.rel (%p156) target = $region16
        $region15: #{_forward_impl.1} parent=11 // pred_region
          %s160 = ssub.s32 12288, 12288
          %161 = vsyncadd [#allocation6], %s160
          %s162 = sshll.u32 [#allocation5], 4
          %s163 = int_to_ptr.vmem [resolvable:$true] %s162
          %168 = dma.hbm_to_vmem [thread:$0]  %s1, 12288, %s163, [#allocation6], 128, 128, 8
        $region16: #{_forward_impl.1} parent=11 // pred_fallthru
          _
        // Predicated region
        $region17: #{_forward_impl.1} parent=11 // pred_check
          %p169 = pneg %p89
        $region18: #{_forward_impl.1} parent=11 // pred_check_branch
          %171 = sbr.rel (%p169) target = $region20
        $region19: #{_forward_impl.1} parent=11 // pred_region
          _
        $region20: #{_forward_impl.1} parent=11 // pred_fallthru
          _
      $region12: #{_forward_impl.1} parent=5 // pred_fallthru
        _
      %p172 = scmp.lt.s32.totalorder %s21, 2
      // Predicated region
      $region21: #{_forward_impl.1} parent=5 // pred_check
        %p173 = pneg %p172
      $region22: #{_forward_impl.1} parent=5 // pred_check_branch
        %175 = sbr.rel (%p173) target = $region24
      $region23: #{_forward_impl.1} parent=5 // pred_region
        // Predicated region
        $region25: #{_forward_impl.1} parent=23 // pred_check
          %p176 = pneg %p41
        $region26: #{_forward_impl.1} parent=23 // pred_check_branch
          %178 = sbr.rel (%p176) target = $region28
        $region27: #{_forward_impl.1} parent=23 // pred_region
          %s179 = sand.u32 %s31, 1
          %s180 = scalar_lea.sflag [#allocation3], %s179
          %s181 = sand.u32 %s31, 1
          %s182 = smul.addr %s181, 8
          %s183 = scalar_lea.vmem [#allocation2], %s182
          %s185 = ssub.s32 128, 128
          %186 = vsyncadd %s180, %s185
          %s187 = smul.addr %s21, 128
          %s188 = scalar_lea.hbm %s0, %s187
          %s190 = sshll.u32 %s183, 4
          %s191 = int_to_ptr.vmem [resolvable:$true] %s190
          %193 = dma.hbm_to_vmem [thread:$0]  %s188, 128, %s191, %s180
        $region28: #{_forward_impl.1} parent=23 // pred_fallthru
          _
      $region24: #{_forward_impl.1} parent=5 // pred_fallthru
        _
      %p194 = scmp.le.s32.totalorder 1, %s21
      %p195 = scmp.lt.s32.totalorder %s21, 3
      %p196 = pnand %p194, %p195
      %p197 = pneg %p196
      // Predicated region
      $region29: #{_forward_impl.1} parent=5 // pred_check
        _
      $region30: #{_forward_impl.1} parent=5 // pred_check_branch
        %199 = sbr.rel (%p196) target = $region32
      $region31: #{_forward_impl.1} parent=5 // pred_region
        %s200 = ssub.s32 %s21, 1
        %s201 = sand.u32 %s34, 1
        %s202 = scalar_lea.sflag [#allocation3], %s201
        %s203 = sand.u32 %s34, 1
        %s204 = smul.addr %s203, 8
        %s205 = scalar_lea.vmem [#allocation2], %s204
        // Predicated region
        $region33: #{_forward_impl.1} parent=31 // pred_check
          %p206 = pneg %p47
        $region34: #{_forward_impl.1} parent=31 // pred_check_branch
          %208 = sbr.rel (%p206) target = $region36
        $region35: #{_forward_impl.1} parent=31 // pred_region
          %209 = dma.done %s202, 128
        $region36: #{_forward_impl.1} parent=31 // pred_fallthru
          _
        // Predicated region
        $region37: #{_forward_impl.1} parent=31 // pred_check
          %p210 = pneg %p68
        $region38: #{_forward_impl.1} parent=31 // pred_check_branch
          %212 = sbr.rel (%p210) target = $region40
        $region39: #{_forward_impl.1} parent=31 // pred_region
          %213 = dma.done [#allocation6], 12288
        $region40: #{_forward_impl.1} parent=31 // pred_fallthru
          _
        %s214 = sand.u32 %s34, 1
        %s215 = scalar_lea.sflag [#allocation3], %s214
        %s216 = sand.u32 %s34, 1
        %s217 = smul.addr %s216, 8
        %s218 = scalar_lea.vmem [#allocation2], %s217
        %p219 = pneg %p47
        %p220 = pneg %p44
        %p221 = pneg %p68
        %p222 = pneg %p65
        %p223 = pneg %p89
        %p224 = pneg %p86
        %p225 = pneg %p115
        %p226 = pneg %p112
        %s227 = sand.u32 %s102, 1
        %s228 = scalar_lea.sflag [#allocation4], %s227
        %s229 = sand.u32 %s102, 1
        %s230 = smul.addr %s229, 8
        %s231 = scalar_lea.vmem [#allocation7], %s230
        %p232 = pneg %p141
        %p233 = pneg %p138
        %s234 = sand.u32 %s128, 1
        %s235 = scalar_lea.sflag [#allocation9], %s234
        %s236 = sand.u32 %s128, 1
        %s237 = smul.addr %s236, 32
        %s238 = scalar_lea.vmem [#allocation8], %s237
        %v239 = vld [vmem:[%s205] sm:$0xff]
        %v240 = vld [vmem:[#allocation5] sm:$0xff]
        %v241 = vld [vmem:[#allocation5 + $0x8] sm:$0xff]
        %v242 = vld [vmem:[#allocation5 + $0x10] sm:$0xff]
        %v243 = vld [vmem:[#allocation5 + $0x18] sm:$0xff]
        %v244 = vld [vmem:[#allocation5 + $0x20] sm:$0xff]
        %v245 = vld [vmem:[#allocation5 + $0x28] sm:$0xff]
        %v246 = vld [vmem:[#allocation5 + $0x30] sm:$0xff]
        %v247 = vld [vmem:[#allocation5 + $0x38] sm:$0xff]
        %v248 = vld [vmem:[#allocation5 + $0x40] sm:$0xff]
        %v249 = vld [vmem:[#allocation5 + $0x48] sm:$0xff]
        %v250 = vld [vmem:[#allocation5 + $0x50] sm:$0xff]
        %v251 = vld [vmem:[#allocation5 + $0x58] sm:$0xff]
        %v252 = vld [vmem:[#allocation5 + $0x60] sm:$0xff]
        %v253 = vld [vmem:[#allocation5 + $0x68] sm:$0xff]
        %v254 = vld [vmem:[#allocation5 + $0x70] sm:$0xff]
        %v255 = vld [vmem:[#allocation5 + $0x78] sm:$0xff]
        %v256 = vld [vmem:[%s2] sm:$0x1]
        %v257 = vlaneseq
        %v258 = vshrl.u32 %v257, 7
        %v259 = vsub.s32 0, %v258
        %v260 = vrot.slane %v256, %v259
        %261 = vmatprep.subr.mxu0 0.0
        %262 = vmatpush1.msra.mxu0 %v240
        %263 = vmatprep.subr.mxu0 0.0
        %264 = vmatpush1.msra.mxu0 %v241
        %265 = vmatprep.subr.mxu0 0.0
        %266 = vmatpush1.msra.mxu0 %v242
        %267 = vmatprep.subr.mxu0 0.0
        %268 = vmatpush1.msra.mxu0 %v243
        %269 = vmatprep.subr.mxu0 0.0
        %270 = vmatpush1.msra.mxu0 %v244
        %271 = vmatprep.subr.mxu0 0.0
        %272 = vmatpush1.msra.mxu0 %v245
        %273 = vmatprep.subr.mxu0 0.0
        %274 = vmatpush1.msra.mxu0 %v246
        %275 = vmatprep.subr.mxu0 0.0
        %276 = vmatpush1.msra.mxu0 %v247
        %277 = vmatprep.subr.mxu0 0.0
        %278 = vmatpush1.msra.mxu0 %v248
        %279 = vmatprep.subr.mxu0 0.0
        %280 = vmatpush1.msra.mxu0 %v249
        %281 = vmatprep.subr.mxu0 0.0
        %282 = vmatpush1.msra.mxu0 %v250
        %283 = vmatprep.subr.mxu0 0.0
        %284 = vmatpush1.msra.mxu0 %v251
        %285 = vmatprep.subr.mxu0 0.0
        %286 = vmatpush1.msra.mxu0 %v252
        %287 = vmatprep.subr.mxu0 0.0
        %288 = vmatpush1.msra.mxu0 %v253
        %289 = vmatprep.subr.mxu0 0.0
        %290 = vmatpush1.msra.mxu0 %v254
        %291 = vmatprep.subr.mxu0 0.0
        %292 = vmatpush1.msra.mxu0 %v255
        %293 = vmatprep.subr.mxu0 0.0
        %294 = vmatpush1.msra.mxu0 0.0
        %295 = vmatprep.subr.mxu0 0.0
        %296 = vmatpush1.msra.mxu0 0.0
        %297 = vmatprep.subr.mxu0 0.0
        %298 = vmatpush1.msra.mxu0 0.0
        %299 = vmatprep.subr.mxu0 0.0
        %300 = vmatpush1.msra.mxu0 0.0
        %301 = vmatprep.subr.mxu0 0.0
        %302 = vmatpush1.msra.mxu0 0.0
        %303 = vmatprep.subr.mxu0 0.0
        %304 = vmatpush1.msra.mxu0 0.0
        %305 = vmatprep.subr.mxu0 0.0
        %306 = vmatpush1.msra.mxu0 0.0
        %307 = vmatprep.subr.mxu0 0.0
        %308 = vmatpush1.msra.mxu0 0.0
        %309 = vmatprep.subr.mxu0 0.0
        %310 = vmatpush1.msra.mxu0 0.0
        %311 = vmatprep.subr.mxu0 0.0
        %312 = vmatpush1.msra.mxu0 0.0
        %313 = vmatprep.subr.mxu0 0.0
        %314 = vmatpush1.msra.mxu0 0.0
        %315 = vmatprep.subr.mxu0 0.0
        %316 = vmatpush1.msra.mxu0 0.0
        %317 = vmatprep.subr.mxu0 0.0
        %318 = vmatpush1.msra.mxu0 0.0
        %319 = vmatprep.subr.mxu0 0.0
        %320 = vmatpush1.msra.mxu0 0.0
        %321 = vmatprep.subr.mxu0 0.0
        %322 = vmatpush1.msra.mxu0 0.0
        %323 = vmatprep.subr.mxu0 0.0
        %324 = vmatpush1.msra.mxu0 0.0
        %325 = vmatprep.mubr.f32.mxu0 0.0
        %326 = vmatmul.mubr.f32.gmra.mrb[0].mxu0 %v239
        %v327 = vpop.f32.mrb[0].mxu0
        %v328 = vadd.f32 %v260, %v327
        %v329 = vpop.f32.mrb[0].mxu0
        %330 = vdwg.mxu0
        %331 = vst [vmem:[%s238] sm:$0xff] %v328
        %s332 = scalar_lea.vmem [#allocation5], 128
        %v333 = vld [vmem:[%s332] sm:$0xff]
        %v334 = vld [vmem:[%s332 + $0x8] sm:$0xff]
        %v335 = vld [vmem:[%s332 + $0x10] sm:$0xff]
        %v336 = vld [vmem:[%s332 + $0x18] sm:$0xff]
        %v337 = vld [vmem:[%s332 + $0x20] sm:$0xff]
        %v338 = vld [vmem:[%s332 + $0x28] sm:$0xff]
        %v339 = vld [vmem:[%s332 + $0x30] sm:$0xff]
        %v340 = vld [vmem:[%s332 + $0x38] sm:$0xff]
        %v341 = vld [vmem:[%s332 + $0x40] sm:$0xff]
        %v342 = vld [vmem:[%s332 + $0x48] sm:$0xff]
        %v343 = vld [vmem:[%s332 + $0x50] sm:$0xff]
        %v344 = vld [vmem:[%s332 + $0x58] sm:$0xff]
        %v345 = vld [vmem:[%s332 + $0x60] sm:$0xff]
        %v346 = vld [vmem:[%s332 + $0x68] sm:$0xff]
        %v347 = vld [vmem:[%s332 + $0x70] sm:$0xff]
        %v348 = vld [vmem:[%s332 + $0x78] sm:$0xff]
        %v349 = vld [vmem:[%s2 + $0x1] sm:$0x1]
        %v350 = vlaneseq
        %v351 = vshrl.u32 %v350, 7
        %v352 = vsub.s32 0, %v351
        %v353 = vrot.slane %v349, %v352
        %354 = vmatprep.subr.mxu0 0.0
        %355 = vmatpush1.msra.mxu0 %v333
        %356 = vmatprep.subr.mxu0 0.0
        %357 = vmatpush1.msra.mxu0 %v334
        %358 = vmatprep.subr.mxu0 0.0
        %359 = vmatpush1.msra.mxu0 %v335
        %360 = vmatprep.subr.mxu0 0.0
        %361 = vmatpush1.msra.mxu0 %v336
        %362 = vmatprep.subr.mxu0 0.0
        %363 = vmatpush1.msra.mxu0 %v337
        %364 = vmatprep.subr.mxu0 0.0
        %365 = vmatpush1.msra.mxu0 %v338
        %366 = vmatprep.subr.mxu0 0.0
        %367 = vmatpush1.msra.mxu0 %v339
        %368 = vmatprep.subr.mxu0 0.0
        %369 = vmatpush1.msra.mxu0 %v340
        %370 = vmatprep.subr.mxu0 0.0
        %371 = vmatpush1.msra.mxu0 %v341
        %372 = vmatprep.subr.mxu0 0.0
        %373 = vmatpush1.msra.mxu0 %v342
        %374 = vmatprep.subr.mxu0 0.0
        %375 = vmatpush1.msra.mxu0 %v343
        %376 = vmatprep.subr.mxu0 0.0
        %377 = vmatpush1.msra.mxu0 %v344
        %378 = vmatprep.subr.mxu0 0.0
        %379 = vmatpush1.msra.mxu0 %v345
        %380 = vmatprep.subr.mxu0 0.0
        %381 = vmatpush1.msra.mxu0 %v346
        %382 = vmatprep.subr.mxu0 0.0
        %383 = vmatpush1.msra.mxu0 %v347
        %384 = vmatprep.subr.mxu0 0.0
        %385 = vmatpush1.msra.mxu0 %v348
        %386 = vmatprep.subr.mxu0 0.0
        %387 = vmatpush1.msra.mxu0 0.0
        %388 = vmatprep.subr.mxu0 0.0
        %389 = vmatpush1.msra.mxu0 0.0
        %390 = vmatprep.subr.mxu0 0.0
        %391 = vmatpush1.msra.mxu0 0.0
        %392 = vmatprep.subr.mxu0 0.0
        %393 = vmatpush1.msra.mxu0 0.0
        %394 = vmatprep.subr.mxu0 0.0
        %395 = vmatpush1.msra.mxu0 0.0
        %396 = vmatprep.subr.mxu0 0.0
        %397 = vmatpush1.msra.mxu0 0.0
        %398 = vmatprep.subr.mxu0 0.0
        %399 = vmatpush1.msra.mxu0 0.0
        %400 = vmatprep.subr.mxu0 0.0
        %401 = vmatpush1.msra.mxu0 0.0
        %402 = vmatprep.subr.mxu0 0.0
        %403 = vmatpush1.msra.mxu0 0.0
        %404 = vmatprep.subr.mxu0 0.0
        %405 = vmatpush1.msra.mxu0 0.0
        %406 = vmatprep.subr.mxu0 0.0
        %407 = vmatpush1.msra.mxu0 0.0
        %408 = vmatprep.subr.mxu0 0.0
        %409 = vmatpush1.msra.mxu0 0.0
        %410 = vmatprep.subr.mxu0 0.0
        %411 = vmatpush1.msra.mxu0 0.0
        %412 = vmatprep.subr.mxu0 0.0
        %413 = vmatpush1.msra.mxu0 0.0
        %414 = vmatprep.subr.mxu0 0.0
        %415 = vmatpush1.msra.mxu0 0.0
        %416 = vmatprep.subr.mxu0 0.0
        %417 = vmatpush1.msra.mxu0 0.0
        %418 = vmatprep.mubr.f32.mxu0 0.0
        %419 = vmatmul.mubr.f32.gmra.mrb[0].mxu0 %v328
        %v420 = vpop.f32.mrb[0].mxu0
        %v421 = vadd.f32 %v353, %v420
        %v422 = vpop.f32.mrb[0].mxu0
        %423 = vdwg.mxu0
        %s424 = scalar_lea.vmem %s238, 8 [#allocation8]
        %425 = vst [vmem:[%s424] sm:$0xff] %v421
        %s426 = scalar_lea.vmem [#allocation5], 256
        %v427 = vld [vmem:[%s426] sm:$0xff]
        %v428 = vld [vmem:[%s426 + $0x8] sm:$0xff]
        %v429 = vld [vmem:[%s426 + $0x10] sm:$0xff]
        %v430 = vld [vmem:[%s426 + $0x18] sm:$0xff]
        %v431 = vld [vmem:[%s426 + $0x20] sm:$0xff]
        %v432 = vld [vmem:[%s426 + $0x28] sm:$0xff]
        %v433 = vld [vmem:[%s426 + $0x30] sm:$0xff]
        %v434 = vld [vmem:[%s426 + $0x38] sm:$0xff]
        %v435 = vld [vmem:[%s426 + $0x40] sm:$0xff]
        %v436 = vld [vmem:[%s426 + $0x48] sm:$0xff]
        %v437 = vld [vmem:[%s426 + $0x50] sm:$0xff]
        %v438 = vld [vmem:[%s426 + $0x58] sm:$0xff]
        %v439 = vld [vmem:[%s426 + $0x60] sm:$0xff]
        %v440 = vld [vmem:[%s426 + $0x68] sm:$0xff]
        %v441 = vld [vmem:[%s426 + $0x70] sm:$0xff]
        %v442 = vld [vmem:[%s426 + $0x78] sm:$0xff]
        %v443 = vld [vmem:[%s2 + $0x2] sm:$0x1]
        %v444 = vlaneseq
        %v445 = vshrl.u32 %v444, 7
        %v446 = vsub.s32 0, %v445
        %v447 = vrot.slane %v443, %v446
        %448 = vmatprep.subr.mxu0 0.0
        %449 = vmatpush1.msra.mxu0 %v427
        %450 = vmatprep.subr.mxu0 0.0
        %451 = vmatpush1.msra.mxu0 %v428
        %452 = vmatprep.subr.mxu0 0.0
        %453 = vmatpush1.msra.mxu0 %v429
        %454 = vmatprep.subr.mxu0 0.0
        %455 = vmatpush1.msra.mxu0 %v430
        %456 = vmatprep.subr.mxu0 0.0
        %457 = vmatpush1.msra.mxu0 %v431
        %458 = vmatprep.subr.mxu0 0.0
        %459 = vmatpush1.msra.mxu0 %v432
        %460 = vmatprep.subr.mxu0 0.0
        %461 = vmatpush1.msra.mxu0 %v433
        %462 = vmatprep.subr.mxu0 0.0
        %463 = vmatpush1.msra.mxu0 %v434
        %464 = vmatprep.subr.mxu0 0.0
        %465 = vmatpush1.msra.mxu0 %v435
        %466 = vmatprep.subr.mxu0 0.0
        %467 = vmatpush1.msra.mxu0 %v436
        %468 = vmatprep.subr.mxu0 0.0
        %469 = vmatpush1.msra.mxu0 %v437
        %470 = vmatprep.subr.mxu0 0.0
        %471 = vmatpush1.msra.mxu0 %v438
        %472 = vmatprep.subr.mxu0 0.0
        %473 = vmatpush1.msra.mxu0 %v439
        %474 = vmatprep.subr.mxu0 0.0
        %475 = vmatpush1.msra.mxu0 %v440
        %476 = vmatprep.subr.mxu0 0.0
        %477 = vmatpush1.msra.mxu0 %v441
        %478 = vmatprep.subr.mxu0 0.0
        %479 = vmatpush1.msra.mxu0 %v442
        %480 = vmatprep.subr.mxu0 0.0
        %481 = vmatpush1.msra.mxu0 0.0
        %482 = vmatprep.subr.mxu0 0.0
        %483 = vmatpush1.msra.mxu0 0.0
        %484 = vmatprep.subr.mxu0 0.0
        %485 = vmatpush1.msra.mxu0 0.0
        %486 = vmatprep.subr.mxu0 0.0
        %487 = vmatpush1.msra.mxu0 0.0
        %488 = vmatprep.subr.mxu0 0.0
        %489 = vmatpush1.msra.mxu0 0.0
        %490 = vmatprep.subr.mxu0 0.0
        %491 = vmatpush1.msra.mxu0 0.0
        %492 = vmatprep.subr.mxu0 0.0
        %493 = vmatpush1.msra.mxu0 0.0
        %494 = vmatprep.subr.mxu0 0.0
        %495 = vmatpush1.msra.mxu0 0.0
        %496 = vmatprep.subr.mxu0 0.0
        %497 = vmatpush1.msra.mxu0 0.0
        %498 = vmatprep.subr.mxu0 0.0
        %499 = vmatpush1.msra.mxu0 0.0
        %500 = vmatprep.subr.mxu0 0.0
        %501 = vmatpush1.msra.mxu0 0.0
        %502 = vmatprep.subr.mxu0 0.0
        %503 = vmatpush1.msra.mxu0 0.0
        %504 = vmatprep.subr.mxu0 0.0
        %505 = vmatpush1.msra.mxu0 0.0
        %506 = vmatprep.subr.mxu0 0.0
        %507 = vmatpush1.msra.mxu0 0.0
        %508 = vmatprep.subr.mxu0 0.0
        %509 = vmatpush1.msra.mxu0 0.0
        %510 = vmatprep.subr.mxu0 0.0
        %511 = vmatpush1.msra.mxu0 0.0
        %512 = vmatprep.mubr.f32.mxu0 0.0
        %513 = vmatmul.mubr.f32.gmra.mrb[0].mxu0 %v421
        %v514 = vpop.f32.mrb[0].mxu0
        %v515 = vadd.f32 %v447, %v514
        %v516 = vpop.f32.mrb[0].mxu0
        %517 = vdwg.mxu0
        %s518 = scalar_lea.vmem %s238, 16 [#allocation8]
        %519 = vst [vmem:[%s518] sm:$0xff] %v515
        %s520 = scalar_lea.vmem [#allocation5], 384
        %v521 = vld [vmem:[%s520] sm:$0xff]
        %v522 = vld [vmem:[%s520 + $0x8] sm:$0xff]
        %v523 = vld [vmem:[%s520 + $0x10] sm:$0xff]
        %v524 = vld [vmem:[%s520 + $0x18] sm:$0xff]
        %v525 = vld [vmem:[%s520 + $0x20] sm:$0xff]
        %v526 = vld [vmem:[%s520 + $0x28] sm:$0xff]
        %v527 = vld [vmem:[%s520 + $0x30] sm:$0xff]
        %v528 = vld [vmem:[%s520 + $0x38] sm:$0xff]
        %v529 = vld [vmem:[%s520 + $0x40] sm:$0xff]
        %v530 = vld [vmem:[%s520 + $0x48] sm:$0xff]
        %v531 = vld [vmem:[%s520 + $0x50] sm:$0xff]
        %v532 = vld [vmem:[%s520 + $0x58] sm:$0xff]
        %v533 = vld [vmem:[%s520 + $0x60] sm:$0xff]
        %v534 = vld [vmem:[%s520 + $0x68] sm:$0xff]
        %v535 = vld [vmem:[%s520 + $0x70] sm:$0xff]
        %v536 = vld [vmem:[%s520 + $0x78] sm:$0xff]
        %v537 = vld [vmem:[%s2 + $0x3] sm:$0x1]
        %v538 = vlaneseq
        %v539 = vshrl.u32 %v538, 7
        %v540 = vsub.s32 0, %v539
        %v541 = vrot.slane %v537, %v540
        %542 = vmatprep.subr.mxu0 0.0
        %543 = vmatpush1.msra.mxu0 %v521
        %544 = vmatprep.subr.mxu0 0.0
        %545 = vmatpush1.msra.mxu0 %v522
        %546 = vmatprep.subr.mxu0 0.0
        %547 = vmatpush1.msra.mxu0 %v523
        %548 = vmatprep.subr.mxu0 0.0
        %549 = vmatpush1.msra.mxu0 %v524
        %550 = vmatprep.subr.mxu0 0.0
        %551 = vmatpush1.msra.mxu0 %v525
        %552 = vmatprep.subr.mxu0 0.0
        %553 = vmatpush1.msra.mxu0 %v526
        %554 = vmatprep.subr.mxu0 0.0
        %555 = vmatpush1.msra.mxu0 %v527
        %556 = vmatprep.subr.mxu0 0.0
        %557 = vmatpush1.msra.mxu0 %v528
        %558 = vmatprep.subr.mxu0 0.0
        %559 = vmatpush1.msra.mxu0 %v529
        %560 = vmatprep.subr.mxu0 0.0
        %561 = vmatpush1.msra.mxu0 %v530
        %562 = vmatprep.subr.mxu0 0.0
        %563 = vmatpush1.msra.mxu0 %v531
        %564 = vmatprep.subr.mxu0 0.0
        %565 = vmatpush1.msra.mxu0 %v532
        %566 = vmatprep.subr.mxu0 0.0
        %567 = vmatpush1.msra.mxu0 %v533
        %568 = vmatprep.subr.mxu0 0.0
        %569 = vmatpush1.msra.mxu0 %v534
        %570 = vmatprep.subr.mxu0 0.0
        %571 = vmatpush1.msra.mxu0 %v535
        %572 = vmatprep.subr.mxu0 0.0
        %573 = vmatpush1.msra.mxu0 %v536
        %574 = vmatprep.subr.mxu0 0.0
        %575 = vmatpush1.msra.mxu0 0.0
        %576 = vmatprep.subr.mxu0 0.0
        %577 = vmatpush1.msra.mxu0 0.0
        %578 = vmatprep.subr.mxu0 0.0
        %579 = vmatpush1.msra.mxu0 0.0
        %580 = vmatprep.subr.mxu0 0.0
        %581 = vmatpush1.msra.mxu0 0.0
        %582 = vmatprep.subr.mxu0 0.0
        %583 = vmatpush1.msra.mxu0 0.0
        %584 = vmatprep.subr.mxu0 0.0
        %585 = vmatpush1.msra.mxu0 0.0
        %586 = vmatprep.subr.mxu0 0.0
        %587 = vmatpush1.msra.mxu0 0.0
        %588 = vmatprep.subr.mxu0 0.0
        %589 = vmatpush1.msra.mxu0 0.0
        %590 = vmatprep.subr.mxu0 0.0
        %591 = vmatpush1.msra.mxu0 0.0
        %592 = vmatprep.subr.mxu0 0.0
        %593 = vmatpush1.msra.mxu0 0.0
        %594 = vmatprep.subr.mxu0 0.0
        %595 = vmatpush1.msra.mxu0 0.0
        %596 = vmatprep.subr.mxu0 0.0
        %597 = vmatpush1.msra.mxu0 0.0
        %598 = vmatprep.subr.mxu0 0.0
        %599 = vmatpush1.msra.mxu0 0.0
        %600 = vmatprep.subr.mxu0 0.0
        %601 = vmatpush1.msra.mxu0 0.0
        %602 = vmatprep.subr.mxu0 0.0
        %603 = vmatpush1.msra.mxu0 0.0
        %604 = vmatprep.subr.mxu0 0.0
        %605 = vmatpush1.msra.mxu0 0.0
        %606 = vmatprep.mubr.f32.mxu0 0.0
        %607 = vmatmul.mubr.f32.gmra.mrb[0].mxu0 %v515
        %v608 = vpop.f32.mrb[0].mxu0
        %v609 = vadd.f32 %v541, %v608
        %v610 = vpop.f32.mrb[0].mxu0
        %611 = vdwg.mxu0
        %s612 = scalar_lea.vmem %s238, 24 [#allocation8]
        %613 = vst [vmem:[%s612] sm:$0xff] %v609
        %s614 = scalar_lea.vmem [#allocation5], 512
        %v615 = vld [vmem:[%s614] sm:$0xff]
        %v616 = vld [vmem:[%s614 + $0x8] sm:$0xff]
        %v617 = vld [vmem:[%s614 + $0x10] sm:$0xff]
        %v618 = vld [vmem:[%s614 + $0x18] sm:$0xff]
        %v619 = vld [vmem:[%s614 + $0x20] sm:$0xff]
        %v620 = vld [vmem:[%s614 + $0x28] sm:$0xff]
        %v621 = vld [vmem:[%s614 + $0x30] sm:$0xff]
        %v622 = vld [vmem:[%s614 + $0x38] sm:$0xff]
        %v623 = vld [vmem:[%s614 + $0x40] sm:$0xff]
        %v624 = vld [vmem:[%s614 + $0x48] sm:$0xff]
        %v625 = vld [vmem:[%s614 + $0x50] sm:$0xff]
        %v626 = vld [vmem:[%s614 + $0x58] sm:$0xff]
        %v627 = vld [vmem:[%s614 + $0x60] sm:$0xff]
        %v628 = vld [vmem:[%s614 + $0x68] sm:$0xff]
        %v629 = vld [vmem:[%s614 + $0x70] sm:$0xff]
        %v630 = vld [vmem:[%s614 + $0x78] sm:$0xff]
        %v631 = vld [vmem:[%s2 + $0x4] sm:$0x1]
        %v632 = vlaneseq
        %v633 = vshrl.u32 %v632, 7
        %v634 = vsub.s32 0, %v633
        %v635 = vrot.slane %v631, %v634
        %636 = vmatprep.subr.mxu0 0.0
        %637 = vmatpush1.msra.mxu0 %v615
        %638 = vmatprep.subr.mxu0 0.0
        %639 = vmatpush1.msra.mxu0 %v616
        %640 = vmatprep.subr.mxu0 0.0
        %641 = vmatpush1.msra.mxu0 %v617
        %642 = vmatprep.subr.mxu0 0.0
        %643 = vmatpush1.msra.mxu0 %v618
        %644 = vmatprep.subr.mxu0 0.0
        %645 = vmatpush1.msra.mxu0 %v619
        %646 = vmatprep.subr.mxu0 0.0
        %647 = vmatpush1.msra.mxu0 %v620
        %648 = vmatprep.subr.mxu0 0.0
        %649 = vmatpush1.msra.mxu0 %v621
        %650 = vmatprep.subr.mxu0 0.0
        %651 = vmatpush1.msra.mxu0 %v622
        %652 = vmatprep.subr.mxu0 0.0
        %653 = vmatpush1.msra.mxu0 %v623
        %654 = vmatprep.subr.mxu0 0.0
        %655 = vmatpush1.msra.mxu0 %v624
        %656 = vmatprep.subr.mxu0 0.0
        %657 = vmatpush1.msra.mxu0 %v625
        %658 = vmatprep.subr.mxu0 0.0
        %659 = vmatpush1.msra.mxu0 %v626
        %660 = vmatprep.subr.mxu0 0.0
        %661 = vmatpush1.msra.mxu0 %v627
        %662 = vmatprep.subr.mxu0 0.0
        %663 = vmatpush1.msra.mxu0 %v628
        %664 = vmatprep.subr.mxu0 0.0
        %665 = vmatpush1.msra.mxu0 %v629
        %666 = vmatprep.subr.mxu0 0.0
        %667 = vmatpush1.msra.mxu0 %v630
        %668 = vmatprep.subr.mxu0 0.0
        %669 = vmatpush1.msra.mxu0 0.0
        %670 = vmatprep.subr.mxu0 0.0
        %671 = vmatpush1.msra.mxu0 0.0
        %672 = vmatprep.subr.mxu0 0.0
        %673 = vmatpush1.msra.mxu0 0.0
        %674 = vmatprep.subr.mxu0 0.0
        %675 = vmatpush1.msra.mxu0 0.0
        %676 = vmatprep.subr.mxu0 0.0
        %677 = vmatpush1.msra.mxu0 0.0
        %678 = vmatprep.subr.mxu0 0.0
        %679 = vmatpush1.msra.mxu0 0.0
        %680 = vmatprep.subr.mxu0 0.0
        %681 = vmatpush1.msra.mxu0 0.0
        %682 = vmatprep.subr.mxu0 0.0
        %683 = vmatpush1.msra.mxu0 0.0
        %684 = vmatprep.subr.mxu0 0.0
        %685 = vmatpush1.msra.mxu0 0.0
        %686 = vmatprep.subr.mxu0 0.0
        %687 = vmatpush1.msra.mxu0 0.0
        %688 = vmatprep.subr.mxu0 0.0
        %689 = vmatpush1.msra.mxu0 0.0
        %690 = vmatprep.subr.mxu0 0.0
        %691 = vmatpush1.msra.mxu0 0.0
        %692 = vmatprep.subr.mxu0 0.0
        %693 = vmatpush1.msra.mxu0 0.0
        %694 = vmatprep.subr.mxu0 0.0
        %695 = vmatpush1.msra.mxu0 0.0
        %696 = vmatprep.subr.mxu0 0.0
        %697 = vmatpush1.msra.mxu0 0.0
        %698 = vmatprep.subr.mxu0 0.0
        %699 = vmatpush1.msra.mxu0 0.0
        %700 = vmatprep.mubr.f32.mxu0 0.0
        %701 = vmatmul.mubr.f32.gmra.mrb[0].mxu0 %v609
        %v702 = vpop.f32.mrb[0].mxu0
        %v703 = vadd.f32 %v635, %v702
        %v704 = vpop.f32.mrb[0].mxu0
        %705 = vdwg.mxu0
        %s706 = scalar_lea.vmem [#allocation5], 640
        %v707 = vld [vmem:[%s706] sm:$0xff]
        %v708 = vld [vmem:[%s706 + $0x8] sm:$0xff]
        %v709 = vld [vmem:[%s706 + $0x10] sm:$0xff]
        %v710 = vld [vmem:[%s706 + $0x18] sm:$0xff]
        %v711 = vld [vmem:[%s706 + $0x20] sm:$0xff]
        %v712 = vld [vmem:[%s706 + $0x28] sm:$0xff]
        %v713 = vld [vmem:[%s706 + $0x30] sm:$0xff]
        %v714 = vld [vmem:[%s706 + $0x38] sm:$0xff]
        %v715 = vld [vmem:[%s706 + $0x40] sm:$0xff]
        %v716 = vld [vmem:[%s706 + $0x48] sm:$0xff]
        %v717 = vld [vmem:[%s706 + $0x50] sm:$0xff]
        %v718 = vld [vmem:[%s706 + $0x58] sm:$0xff]
        %v719 = vld [vmem:[%s706 + $0x60] sm:$0xff]
        %v720 = vld [vmem:[%s706 + $0x68] sm:$0xff]
        %v721 = vld [vmem:[%s706 + $0x70] sm:$0xff]
        %v722 = vld [vmem:[%s706 + $0x78] sm:$0xff]
        %v723 = vld [vmem:[%s2 + $0x5] sm:$0x1]
        %v724 = vlaneseq
        %v725 = vshrl.u32 %v724, 7
        %v726 = vsub.s32 0, %v725
        %v727 = vrot.slane %v723, %v726
        %728 = vmatprep.subr.mxu0 0.0
        %729 = vmatpush1.msra.mxu0 %v707
        %730 = vmatprep.subr.mxu0 0.0
        %731 = vmatpush1.msra.mxu0 %v708
        %732 = vmatprep.subr.mxu0 0.0
        %733 = vmatpush1.msra.mxu0 %v709
        %734 = vmatprep.subr.mxu0 0.0
        %735 = vmatpush1.msra.mxu0 %v710
        %736 = vmatprep.subr.mxu0 0.0
        %737 = vmatpush1.msra.mxu0 %v711
        %738 = vmatprep.subr.mxu0 0.0
        %739 = vmatpush1.msra.mxu0 %v712
        %740 = vmatprep.subr.mxu0 0.0
        %741 = vmatpush1.msra.mxu0 %v713
        %742 = vmatprep.subr.mxu0 0.0
        %743 = vmatpush1.msra.mxu0 %v714
        %744 = vmatprep.subr.mxu0 0.0
        %745 = vmatpush1.msra.mxu0 %v715
        %746 = vmatprep.subr.mxu0 0.0
        %747 = vmatpush1.msra.mxu0 %v716
        %748 = vmatprep.subr.mxu0 0.0
        %749 = vmatpush1.msra.mxu0 %v717
        %750 = vmatprep.subr.mxu0 0.0
        %751 = vmatpush1.msra.mxu0 %v718
        %752 = vmatprep.subr.mxu0 0.0
        %753 = vmatpush1.msra.mxu0 %v719
        %754 = vmatprep.subr.mxu0 0.0
        %755 = vmatpush1.msra.mxu0 %v720
        %756 = vmatprep.subr.mxu0 0.0
        %757 = vmatpush1.msra.mxu0 %v721
        %758 = vmatprep.subr.mxu0 0.0
        %759 = vmatpush1.msra.mxu0 %v722
        %760 = vmatprep.subr.mxu0 0.0
        %761 = vmatpush1.msra.mxu0 0.0
        %762 = vmatprep.subr.mxu0 0.0
        %763 = vmatpush1.msra.mxu0 0.0
        %764 = vmatprep.subr.mxu0 0.0
        %765 = vmatpush1.msra.mxu0 0.0
        %766 = vmatprep.subr.mxu0 0.0
        %767 = vmatpush1.msra.mxu0 0.0
        %768 = vmatprep.subr.mxu0 0.0
        %769 = vmatpush1.msra.mxu0 0.0
        %770 = vmatprep.subr.mxu0 0.0
        %771 = vmatpush1.msra.mxu0 0.0
        %772 = vmatprep.subr.mxu0 0.0
        %773 = vmatpush1.msra.mxu0 0.0
        %774 = vmatprep.subr.mxu0 0.0
        %775 = vmatpush1.msra.mxu0 0.0
        %776 = vmatprep.subr.mxu0 0.0
        %777 = vmatpush1.msra.mxu0 0.0
        %778 = vmatprep.subr.mxu0 0.0
        %779 = vmatpush1.msra.mxu0 0.0
        %780 = vmatprep.subr.mxu0 0.0
        %781 = vmatpush1.msra.mxu0 0.0
        %782 = vmatprep.subr.mxu0 0.0
        %783 = vmatpush1.msra.mxu0 0.0
        %784 = vmatprep.subr.mxu0 0.0
        %785 = vmatpush1.msra.mxu0 0.0
        %786 = vmatprep.subr.mxu0 0.0
        %787 = vmatpush1.msra.mxu0 0.0
        %788 = vmatprep.subr.mxu0 0.0
        %789 = vmatpush1.msra.mxu0 0.0
        %790 = vmatprep.subr.mxu0 0.0
        %791 = vmatpush1.msra.mxu0 0.0
        %792 = vmatprep.mubr.f32.mxu0 0.0
        %793 = vmatmul.mubr.f32.gmra.mrb[0].mxu0 %v703
        %v794 = vpop.f32.mrb[0].mxu0
        %v795 = vadd.f32 %v727, %v794
        %v796 = vpop.f32.mrb[0].mxu0
        %797 = vdwg.mxu0
        %798 = vst [vmem:[%s231] sm:$0xff] %v795
        %s799 = sand.u32 %s102, 1
        %s800 = scalar_lea.sflag [#allocation4], %s799
        %s801 = sand.u32 %s102, 1
        %s802 = smul.addr %s801, 8
        %s803 = scalar_lea.vmem [#allocation7], %s802
        %s804 = sand.u32 %s128, 1
        %s805 = scalar_lea.sflag [#allocation9], %s804
        %s806 = sand.u32 %s128, 1
        %s807 = smul.addr %s806, 32
        %s808 = scalar_lea.vmem [#allocation8], %s807
        // Predicated region
        $region41: #{_forward_impl.1} parent=31 // pred_check
          %p809 = pneg %p112
        $region42: #{_forward_impl.1} parent=31 // pred_check_branch
          %811 = sbr.rel (%p809) target = $region44
        $region43: #{_forward_impl.1} parent=31 // pred_region
          %s813 = ssub.s32 128, 128
          %814 = vsyncadd %s800, %s813
          %s815 = smul.addr %s26, 128
          %s816 = scalar_lea.hbm %s3, %s815
          %s818 = sshll.u32 %s803, 4
          %s819 = int_to_ptr.vmem [resolvable:$true] %s818
          %821 = dma.vmem_to_hbm [thread:$0]  %s819, 128, %s816, %s800
        $region44: #{_forward_impl.1} parent=31 // pred_fallthru
          _
        // Predicated region
        $region45: #{_forward_impl.1} parent=31 // pred_check
          %p822 = pneg %p138
        $region46: #{_forward_impl.1} parent=31 // pred_check_branch
          %824 = sbr.rel (%p822) target = $region48
        $region47: #{_forward_impl.1} parent=31 // pred_region
          %s826 = ssub.s32 512, 512
          %827 = vsyncadd %s805, %s826
          %s828 = smul.addr %s26, 128
          %s829 = scalar_lea.hbm %s4, %s828
          %s830 = sshll.u32 %s808, 4
          %s831 = int_to_ptr.vmem [resolvable:$true] %s830
          %836 = dma.vmem_to_hbm [thread:$0]  %s831, 512, %s829, %s805, 128, 256, 8
        $region48: #{_forward_impl.1} parent=31 // pred_fallthru
          _
      $region32: #{_forward_impl.1} parent=5 // pred_fallthru
        _
      %p837 = scmp.le.s32.totalorder 2, %s21
      // Predicated region
      $region49: #{_forward_impl.1} parent=5 // pred_check
        %p838 = pneg %p837
      $region50: #{_forward_impl.1} parent=5 // pred_check_branch
        %840 = sbr.rel (%p838) target = $region52
      $region51: #{_forward_impl.1} parent=5 // pred_region
        %s841 = ssub.s32 %s21, 2
        // Predicated region
        $region53: #{_forward_impl.1} parent=51 // pred_check
          %p842 = pneg %p118
        $region54: #{_forward_impl.1} parent=51 // pred_check_branch
          %844 = sbr.rel (%p842) target = $region56
        $region55: #{_forward_impl.1} parent=51 // pred_region
          %s845 = sand.u32 %s103, 1
          %s846 = scalar_lea.sflag [#allocation4], %s845
          %s847 = sand.u32 %s103, 1
          %s848 = smul.addr %s847, 8
          %s849 = scalar_lea.vmem [#allocation7], %s848
          %850 = dma.done %s846, 128
        $region56: #{_forward_impl.1} parent=51 // pred_fallthru
          _
        // Predicated region
        $region57: #{_forward_impl.1} parent=51 // pred_check
          %p851 = pneg %p144
        $region58: #{_forward_impl.1} parent=51 // pred_check_branch
          %853 = sbr.rel (%p851) target = $region60
        $region59: #{_forward_impl.1} parent=51 // pred_region
          %s854 = sand.u32 %s129, 1
          %s855 = scalar_lea.sflag [#allocation9], %s854
          %s856 = sand.u32 %s129, 1
          %s857 = smul.addr %s856, 32
          %s858 = scalar_lea.vmem [#allocation8], %s857
          %859 = dma.done %s855, 512
        $region60: #{_forward_impl.1} parent=51 // pred_fallthru
          _
      $region52: #{_forward_impl.1} parent=5 // pred_fallthru
        _
    $region6: #{_forward_impl.1} parent=1 // loop_footer
      %s25 = sadd.s32 1, %s21
    $region7: #{_forward_impl.1} parent=1 // loop_footer_branch
      %20 = sbr.rel target = $region3
    $region8: #{_forward_impl.1} parent=1 // loop_exit
      _
    %860 = vsyncpa [#allocation3], 1
    %s861 = scalar_lea.sflag [#allocation3], 1
    %862 = vsyncpa %s861, 1
    %863 = vsyncpa [#allocation6], 1
    %864 = vsyncpa [#allocation4], 1
    %s865 = scalar_lea.sflag [#allocation4], 1
    %866 = vsyncpa %s865, 1
    %867 = vsyncpa [#allocation9], 1
    %s868 = scalar_lea.sflag [#allocation9], 1
    %869 = vsyncpa %s868, 1

</llo_original>
